<compile_context>
chip_gen: v5e
topology: v5e:2x2
jax: 0.10.0
libtpu: 0.0.40
codegen_flags: <defaults>
</compile_context>

<pallas_src>
import functools
import math

import jax
import jax.numpy as jnp
from jax.experimental import pallas as pl
from jax.experimental.pallas import tpu as pltpu


# ----------------------------------------------------------------------------
# Config (small, consistent with a GPT-2-style LM)
# ----------------------------------------------------------------------------
VOCAB = 128
N_LAYER = 2
N_HEAD = 4
HIDDEN = 32
HEAD_DIM = HIDDEN // N_HEAD
SEQ = 8
BATCH = 2
MAX_POS = 32
LN_EPS = 1e-5


# ----------------------------------------------------------------------------
# In-kernel helpers (pure VMEM math, all f32)
# ----------------------------------------------------------------------------
def _gelu_new(x):
    # GPT-2 "gelu_new" (tanh approximation); tanh goes to the EUP slot.
    return 0.5 * x * (1.0 + jnp.tanh(
        math.sqrt(2.0 / math.pi) * (x + 0.044715 * x * x * x)))


def _layernorm(x, g, b, eps):
    mean = jnp.mean(x, axis=-1, keepdims=True)
    var = jnp.mean(jnp.square(x - mean), axis=-1, keepdims=True)
    return (x - mean) * jax.lax.rsqrt(var + eps) * g + b


# ----------------------------------------------------------------------------
# Fused all-layers GPT-2 kernel (one pallas_call, grid=(N_LAYER,))
# ----------------------------------------------------------------------------
def _gpt2_kernel(h0_ref,
                 ln1_g_ref, ln1_b_ref,
                 q_w_ref, q_b_ref, k_w_ref, k_b_ref, v_w_ref, v_b_ref,
                 proj_w_ref, proj_b_ref,
                 ln2_g_ref, ln2_b_ref,
                 fc_w_ref, fc_b_ref, mlp_w_ref, mlp_b_ref,
                 lnf_g_ref, lnf_b_ref, wte_ref,
                 logits_ref, k_out_ref, v_out_ref,
                 h_scr,
                 *, batch, seq, n_head, head_dim, scale, eps):
    layer = pl.program_id(0)

    # Load the embedded hidden state once; afterwards h stays VMEM-resident in
    # the scratch accumulator across the whole layer grid.
    @pl.when(layer == 0)
    def _():
        h_scr[...] = h0_ref[...].astype(jnp.float32)

    hidden = n_head * head_dim
    h = h_scr[...]

    # --- LN1 + Q/K/V projections (pre-split weights: no sub-vreg slicing) ---
    x = _layernorm(h, ln1_g_ref[...], ln1_b_ref[...], eps)
    q = jnp.dot(x, q_w_ref[...], preferred_element_type=jnp.float32) + q_b_ref[...]
    k = jnp.dot(x, k_w_ref[...], preferred_element_type=jnp.float32) + k_b_ref[...]
    v = jnp.dot(x, v_w_ref[...], preferred_element_type=jnp.float32) + v_b_ref[...]

    # Presents (KV cache) written lane-dense as (B*T, H) per layer; the HF
    # (B, n_head, T, head_dim) layout reshape happens once outside the kernel.
    k_out_ref[...] = k.astype(k_out_ref.dtype)
    v_out_ref[...] = v.astype(v_out_ref.dtype)

    # --- batched causal self-attention ---
    # (B*T, H) -> (n_head*B, T, D): static lane slices + leading-dim stack
    # (leading-dim reshapes are layout-trivial; no 4-D data transpose).
    def split_heads(t):
        t3 = t.reshape(batch, seq, hidden)
        heads = [t3[:, :, i * head_dim:(i + 1) * head_dim]
                 for i in range(n_head)]
        return jnp.stack(heads, axis=0).reshape(n_head * batch, seq, head_dim)

    qh = split_heads(q)
    kh = split_heads(k)
    vh = split_heads(v)

    # S = q @ k^T batched over (head, batch); transpose folded into the MXU.
    s = jax.lax.dot_general(qh, kh, (((2,), (2,)), ((0,), (0,))),
                            preferred_element_type=jnp.float32) * scale
    row = jax.lax.broadcasted_iota(jnp.int32, (seq, seq), 0)
    col = jax.lax.broadcasted_iota(jnp.int32, (seq, seq), 1)
    s = jnp.where((col <= row)[None, :, :], s, jnp.finfo(jnp.float32).min)
    s = s - jnp.max(s, axis=-1, keepdims=True)
    p = jnp.exp(s)
    p = p / jnp.sum(p, axis=-1, keepdims=True)   # exact softmax (tolerance-safe)
    o = jax.lax.dot_general(p, vh, (((2,), (1,)), ((0,), (0,))),
                            preferred_element_type=jnp.float32)  # (nH*B, T, D)

    # Merge heads back to a (B*T, H) register value (no VMEM scratch, no
    # masked partial stores): lane-concat heads, row-concat batch entries.
    attn = jnp.concatenate(
        [jnp.concatenate([o[i * batch + b] for i in range(n_head)], axis=-1)
         for b in range(batch)],
        axis=0)

    # --- output projection + residual ---
    h = h + jnp.dot(attn, proj_w_ref[...],
                    preferred_element_type=jnp.float32) + proj_b_ref[...]

    # --- MLP (LN2 -> FC + gelu -> proj) + residual; h stays VMEM-resident ---
    x2 = _layernorm(h, ln2_g_ref[...], ln2_b_ref[...], eps)
    m = jnp.dot(x2, fc_w_ref[...],
                preferred_element_type=jnp.float32) + fc_b_ref[...]
    m = _gelu_new(m)
    m = jnp.dot(m, mlp_w_ref[...],
                preferred_element_type=jnp.float32) + mlp_b_ref[...]
    h_scr[...] = h + m

    # --- final LN + tied LM head fused into the last layer step ---
    @pl.when(layer == pl.num_programs(0) - 1)
    def _():
        xf = _layernorm(h_scr[...], lnf_g_ref[...], lnf_b_ref[...], eps)
        logits = jax.lax.dot_general(          # x @ wte^T, folded into the MXU
            xf, wte_ref[...], (((1,), (1,)), ((), ())),
            preferred_element_type=jnp.float32)
        logits_ref[...] = logits.astype(logits_ref.dtype)


def gpt2_pallas_call(params, h0):
    """Single pallas_call: all layers + LM head. Returns (logits, k_all, v_all)."""
    M, H = h0.shape
    L = N_LAYER

    def full2d(shape):
        # Un-tiled 2-D operand; same block every layer step (fetched once).
        return pl.BlockSpec(shape, lambda l: (0, 0))

    def stacked(shape2d):
        # Per-layer stacked weight: leading layer dim selected by the grid and
        # squeezed out of the kernel ref; BlockSpec pipeline prefetches layer
        # l+1 weights while layer l computes.
        return pl.BlockSpec((None,) + shape2d, lambda l: (l, 0, 0))

    kernel = functools.partial(
        _gpt2_kernel, batch=BATCH, seq=SEQ, n_head=N_HEAD, head_dim=HEAD_DIM,
        scale=1.0 / math.sqrt(HEAD_DIM), eps=LN_EPS)

    in_specs = [
        full2d((M, H)),                                # h0 (embeddings)
        stacked((1, H)), stacked((1, H)),              # ln1_g, ln1_b
        stacked((H, H)), stacked((1, H)),              # q_w, q_b
        stacked((H, H)), stacked((1, H)),              # k_w, k_b
        stacked((H, H)), stacked((1, H)),              # v_w, v_b
        stacked((H, H)), stacked((1, H)),              # proj_w, proj_b
        stacked((1, H)), stacked((1, H)),              # ln2_g, ln2_b
        stacked((H, 4 * H)), stacked((1, 4 * H)),      # fc_w, fc_b
        stacked((4 * H, H)), stacked((1, H)),          # mlp_w, mlp_b
        full2d((1, H)), full2d((1, H)),                # lnf_g, lnf_b
        full2d((VOCAB, H)),                            # wte (tied LM head)
    ]
    out_specs = [
        pl.BlockSpec((M, VOCAB), lambda l: (0, 0)),       # logits (resident)
        pl.BlockSpec((None, M, H), lambda l: (l, 0, 0)),  # K present, layer l
        pl.BlockSpec((None, M, H), lambda l: (l, 0, 0)),  # V present, layer l
    ]
    out_shape = (
        jax.ShapeDtypeStruct((M, VOCAB), jnp.float32),
        jax.ShapeDtypeStruct((L, M, H), jnp.float32),
        jax.ShapeDtypeStruct((L, M, H), jnp.float32),
    )

    return pl.pallas_call(
        kernel,
        out_shape=out_shape,
        grid_spec=pltpu.PrefetchScalarGridSpec(
            num_scalar_prefetch=0,
            grid=(L,),
            in_specs=in_specs,
            out_specs=out_specs,
            scratch_shapes=[pltpu.VMEM((M, H), jnp.float32)],  # resident h
        ),
        compiler_params=pltpu.CompilerParams(
            # Hidden state carries layer->layer, so the layer axis is a
            # sequential ("arbitrary") grid dimension.
            dimension_semantics=("arbitrary",)),
    )(h0,
      params["ln1_g"], params["ln1_b"],
      params["q_w"], params["q_b"],
      params["k_w"], params["k_b"],
      params["v_w"], params["v_b"],
      params["proj_w"], params["proj_b"],
      params["ln2_g"], params["ln2_b"],
      params["fc_w"], params["fc_b"],
      params["mlp_w"], params["mlp_b"],
      params["lnf_g"], params["lnf_b"],
      params["wte"])


# ----------------------------------------------------------------------------
# Parameters (deterministic init, GPT-2 style normal(0, 0.02)); every per-layer
# weight kind is stored stacked with a leading layer dim for the layer grid.
# ----------------------------------------------------------------------------
def init_params(key):
    def nrm(k, shape, std=0.02):
        return (std * jax.random.normal(k, shape)).astype(jnp.float32)

    ks = jax.random.split(key, 8)
    L, H = N_LAYER, HIDDEN
    return {
        "wte": nrm(ks[0], (VOCAB, H)),
        "wpe": nrm(ks[1], (MAX_POS, H), std=0.01),
        "lnf_g": jnp.ones((1, H), jnp.float32),
        "lnf_b": jnp.zeros((1, H), jnp.float32),
        "ln1_g": jnp.ones((L, 1, H), jnp.float32),
        "ln1_b": jnp.zeros((L, 1, H), jnp.float32),
        "q_w": nrm(ks[2], (L, H, H)),
        "q_b": jnp.zeros((L, 1, H), jnp.float32),
        "k_w": nrm(ks[3], (L, H, H)),
        "k_b": jnp.zeros((L, 1, H), jnp.float32),
        "v_w": nrm(ks[4], (L, H, H)),
        "v_b": jnp.zeros((L, 1, H), jnp.float32),
        "proj_w": nrm(ks[5], (L, H, H)),
        "proj_b": jnp.zeros((L, 1, H), jnp.float32),
        "ln2_g": jnp.ones((L, 1, H), jnp.float32),
        "ln2_b": jnp.zeros((L, 1, H), jnp.float32),
        "fc_w": nrm(ks[6], (L, H, 4 * H)),
        "fc_b": jnp.zeros((L, 1, 4 * H), jnp.float32),
        "mlp_w": nrm(ks[7], (L, 4 * H, H)),
        "mlp_b": jnp.zeros((L, 1, H), jnp.float32),
    }


# ----------------------------------------------------------------------------
# Forward pass (Wrapper.forward ≡ model(input_ids=input_ids) -> logits, presents)
# ----------------------------------------------------------------------------
def gpt2_forward(params, input_ids):
    B, T = input_ids.shape

    # Embedding gathers kept as JAX glue (data-dependent row gather).
    # TODO(synk): could be fused via PrefetchScalarGridSpec + pl.Element row
    # gather on wte at larger B*T.
    h0 = (params["wte"][input_ids]
          + params["wpe"][jnp.arange(T)][None, :, :]).astype(jnp.float32)
    h0 = h0.reshape(B * T, HIDDEN)

    logits, k_all, v_all = gpt2_pallas_call(params, h0)

    # Presents in HF layout (B, n_head, T, head_dim), built from the
    # lane-dense (L, B*T, H) kernel outputs (one reshape+transpose each).
    presents = []
    for li in range(N_LAYER):
        k = k_all[li].reshape(B, T, N_HEAD, HEAD_DIM).transpose(0, 2, 1, 3)
        v = v_all[li].reshape(B, T, N_HEAD, HEAD_DIM).transpose(0, 2, 1, 3)
        presents.append((k, v))

    return logits.reshape(B, T, VOCAB), presents


# ----------------------------------------------------------------------------
if __name__ == "__main__":
    key = jax.random.PRNGKey(0)
    pkey, ikey = jax.random.split(key)
    params = init_params(pkey)
    input_ids = jax.random.randint(ikey, (BATCH, SEQ), 0, VOCAB, dtype=jnp.int32)

    logits, presents = jax.jit(gpt2_forward)(params, input_ids)
    jax.block_until_ready(logits)
    jax.block_until_ready(presents)

    assert logits.shape == (BATCH, SEQ, VOCAB)
    assert len(presents) == N_LAYER
    assert presents[0][0].shape == (BATCH, N_HEAD, SEQ, HEAD_DIM)
    assert bool(jnp.all(jnp.isfinite(logits)))
    print("KERNEL_OK")
</pallas_src>

<mosaic_0001>
module attributes {stable_mosaic.version = 11 : i64} {
  func.func @_gpt2_kernel(%arg0: i32, %arg1: memref<16x32xf32, #tpu.memory_space<vmem>>, %arg2: memref<1x1x32xf32, #tpu.memory_space<vmem>>, %arg3: memref<1x1x32xf32, #tpu.memory_space<vmem>>, %arg4: memref<1x32x32xf32, #tpu.memory_space<vmem>>, %arg5: memref<1x1x32xf32, #tpu.memory_space<vmem>>, %arg6: memref<1x32x32xf32, #tpu.memory_space<vmem>>, %arg7: memref<1x1x32xf32, #tpu.memory_space<vmem>>, %arg8: memref<1x32x32xf32, #tpu.memory_space<vmem>>, %arg9: memref<1x1x32xf32, #tpu.memory_space<vmem>>, %arg10: memref<1x32x32xf32, #tpu.memory_space<vmem>>, %arg11: memref<1x1x32xf32, #tpu.memory_space<vmem>>, %arg12: memref<1x1x32xf32, #tpu.memory_space<vmem>>, %arg13: memref<1x1x32xf32, #tpu.memory_space<vmem>>, %arg14: memref<1x32x128xf32, #tpu.memory_space<vmem>>, %arg15: memref<1x1x128xf32, #tpu.memory_space<vmem>>, %arg16: memref<1x128x32xf32, #tpu.memory_space<vmem>>, %arg17: memref<1x1x32xf32, #tpu.memory_space<vmem>>, %arg18: memref<1x32xf32, #tpu.memory_space<vmem>>, %arg19: memref<1x32xf32, #tpu.memory_space<vmem>>, %arg20: memref<128x32xf32, #tpu.memory_space<vmem>>, %arg21: memref<16x128xf32, #tpu.memory_space<vmem>>, %arg22: memref<1x16x32xf32, #tpu.memory_space<vmem>>, %arg23: memref<1x16x32xf32, #tpu.memory_space<vmem>>, %arg24: memref<16x32xf32, #tpu.memory_space<vmem>>) attributes {dimension_semantics = [#tpu.dimension_semantics<arbitrary>], iteration_bounds = array<i64: 2>, scalar_prefetch = 0 : i64, scratch_operands = 1 : i64, tpu.core_type = #tpu.core_type<tc>, window_params = [{pipeline_mode = #tpu.pipeline_mode<synchronous>, transform_indices = @transform_0, window_bounds = array<i64: 16, 32>}, {transform_indices = @transform_1, window_bounds = array<i64: 1, 1, 32>}, {transform_indices = @transform_2, window_bounds = array<i64: 1, 1, 32>}, {transform_indices = @transform_3, window_bounds = array<i64: 1, 32, 32>}, {transform_indices = @transform_4, window_bounds = array<i64: 1, 1, 32>}, {transform_indices = @transform_5, window_bounds = array<i64: 1, 32, 32>}, {transform_indices = @transform_6, window_bounds = array<i64: 1, 1, 32>}, {transform_indices = @transform_7, window_bounds = array<i64: 1, 32, 32>}, {transform_indices = @transform_8, window_bounds = array<i64: 1, 1, 32>}, {transform_indices = @transform_9, window_bounds = array<i64: 1, 32, 32>}, {transform_indices = @transform_10, window_bounds = array<i64: 1, 1, 32>}, {transform_indices = @transform_11, window_bounds = array<i64: 1, 1, 32>}, {transform_indices = @transform_12, window_bounds = array<i64: 1, 1, 32>}, {transform_indices = @transform_13, window_bounds = array<i64: 1, 32, 128>}, {transform_indices = @transform_14, window_bounds = array<i64: 1, 1, 128>}, {transform_indices = @transform_15, window_bounds = array<i64: 1, 128, 32>}, {transform_indices = @transform_16, window_bounds = array<i64: 1, 1, 32>}, {pipeline_mode = #tpu.pipeline_mode<synchronous>, transform_indices = @transform_17, window_bounds = array<i64: 1, 32>}, {pipeline_mode = #tpu.pipeline_mode<synchronous>, transform_indices = @transform_18, window_bounds = array<i64: 1, 32>}, {pipeline_mode = #tpu.pipeline_mode<synchronous>, transform_indices = @transform_19, window_bounds = array<i64: 128, 32>}, {pipeline_mode = #tpu.pipeline_mode<synchronous>, transform_indices = @transform_20, window_bounds = array<i64: 16, 128>}, {transform_indices = @transform_21, window_bounds = array<i64: 1, 16, 32>}, {transform_indices = @transform_22, window_bounds = array<i64: 1, 16, 32>}]} {
    %c0_i32 = arith.constant 0 : i32
    %0 = arith.cmpi eq, %arg0, %c0_i32 : i32
    %1 = arith.extui %0 : i1 to i32
    %c0_i32_0 = arith.constant 0 : i32
    %2 = arith.cmpi ne, %1, %c0_i32_0 : i32
    scf.if %2 {
      %c0_84 = arith.constant 0 : index
      %c0_85 = arith.constant 0 : index
      %196 = vector.load %arg1[%c0_84, %c0_85] : memref<16x32xf32, #tpu.memory_space<vmem>>, vector<16x32xf32>
      %c0_86 = arith.constant 0 : index
      %c0_87 = arith.constant 0 : index
      %197 = vector.load %arg24[%c0_86, %c0_87] : memref<16x32xf32, #tpu.memory_space<vmem>>, vector<16x32xf32>
      tpu.vector_store %arg24[%c0_86, %c0_87], %196 {strides = array<i32>} : memref<16x32xf32, #tpu.memory_space<vmem>>, vector<16x32xf32>,
    } else {
    }
    %c0 = arith.constant 0 : index
    %c0_1 = arith.constant 0 : index
    %3 = vector.load %arg24[%c0, %c0_1] : memref<16x32xf32, #tpu.memory_space<vmem>>, vector<16x32xf32>
    %c0_2 = arith.constant 0 : index
    %c0_3 = arith.constant 0 : index
    %c0_4 = arith.constant 0 : index
    %4 = vector.load %arg2[%c0_2, %c0_3, %c0_4] : memref<1x1x32xf32, #tpu.memory_space<vmem>>, vector<1x1x32xf32>
    %5 = vector.shape_cast %4 : vector<1x1x32xf32> to vector<1x32xf32>
    %c0_5 = arith.constant 0 : index
    %c0_6 = arith.constant 0 : index
    %c0_7 = arith.constant 0 : index
    %6 = vector.load %arg3[%c0_5, %c0_6, %c0_7] : memref<1x1x32xf32, #tpu.memory_space<vmem>>, vector<1x1x32xf32>
    %7 = vector.shape_cast %6 : vector<1x1x32xf32> to vector<1x32xf32>
    %cst = arith.constant dense<0.000000e+00> : vector<16xf32>
    %8 = vector.multi_reduction <add>, %3, %cst [1] : vector<16x32xf32> to vector<16xf32>
    %9 = vector.shape_cast %8 : vector<16xf32> to vector<16x1xf32>
    %cst_8 = arith.constant 3.200000e+01 : f32
    %10 = vector.broadcast %cst_8 : f32 to vector<16x1xf32>
    %11 = arith.divf %9, %10 : vector<16x1xf32>
    %12 = vector.broadcast %11 : vector<16x1xf32> to vector<16x32xf32>
    %13 = arith.subf %3, %12 : vector<16x32xf32>
    %14 = arith.mulf %13, %13 : vector<16x32xf32>
    %cst_9 = arith.constant dense<0.000000e+00> : vector<16xf32>
    %15 = vector.multi_reduction <add>, %14, %cst_9 [1] : vector<16x32xf32> to vector<16xf32>
    %16 = vector.shape_cast %15 : vector<16xf32> to vector<16x1xf32>
    %cst_10 = arith.constant 3.200000e+01 : f32
    %17 = vector.broadcast %cst_10 : f32 to vector<16x1xf32>
    %18 = arith.divf %16, %17 : vector<16x1xf32>
    %19 = vector.broadcast %11 : vector<16x1xf32> to vector<16x32xf32>
    %20 = arith.subf %3, %19 : vector<16x32xf32>
    %cst_11 = arith.constant 9.99999974E-6 : f32
    %21 = vector.broadcast %cst_11 : f32 to vector<16x1xf32>
    %22 = arith.addf %18, %21 : vector<16x1xf32>
    %23 = math.rsqrt %22 : vector<16x1xf32>
    %24 = vector.broadcast %23 : vector<16x1xf32> to vector<16x32xf32>
    %25 = arith.mulf %20, %24 : vector<16x32xf32>
    %26 = vector.broadcast %5 : vector<1x32xf32> to vector<16x32xf32>
    %27 = arith.mulf %25, %26 : vector<16x32xf32>
    %28 = vector.broadcast %7 : vector<1x32xf32> to vector<16x32xf32>
    %29 = arith.addf %27, %28 : vector<16x32xf32>
    %c0_12 = arith.constant 0 : index
    %c0_13 = arith.constant 0 : index
    %c0_14 = arith.constant 0 : index
    %30 = vector.load %arg4[%c0_12, %c0_13, %c0_14] : memref<1x32x32xf32, #tpu.memory_space<vmem>>, vector<1x32x32xf32>
    %31 = vector.shape_cast %30 : vector<1x32x32xf32> to vector<32x32xf32>
    %cst_15 = arith.constant dense<0.000000e+00> : vector<16x32xf32>
    %32 = tpu.matmul %29, %31, %cst_15 {dimension_numbers = #tpu.dot_dimension_numbers<[1], [0], [0], [1], [0, 0, 1, 1], [], []>} : vector<16x32xf32>, vector<32x32xf32>, vector<16x32xf32> -> vector<16x32xf32>
    %c0_16 = arith.constant 0 : index
    %c0_17 = arith.constant 0 : index
    %c0_18 = arith.constant 0 : index
    %33 = vector.load %arg5[%c0_16, %c0_17, %c0_18] : memref<1x1x32xf32, #tpu.memory_space<vmem>>, vector<1x1x32xf32>
    %34 = vector.shape_cast %33 : vector<1x1x32xf32> to vector<1x32xf32>
    %35 = vector.broadcast %34 : vector<1x32xf32> to vector<16x32xf32>
    %36 = arith.addf %32, %35 : vector<16x32xf32>
    %c0_19 = arith.constant 0 : index
    %c0_20 = arith.constant 0 : index
    %c0_21 = arith.constant 0 : index
    %37 = vector.load %arg6[%c0_19, %c0_20, %c0_21] : memref<1x32x32xf32, #tpu.memory_space<vmem>>, vector<1x32x32xf32>
    %38 = vector.shape_cast %37 : vector<1x32x32xf32> to vector<32x32xf32>
    %cst_22 = arith.constant dense<0.000000e+00> : vector<16x32xf32>
    %39 = tpu.matmul %29, %38, %cst_22 {dimension_numbers = #tpu.dot_dimension_numbers<[1], [0], [0], [1], [0, 0, 1, 1], [], []>} : vector<16x32xf32>, vector<32x32xf32>, vector<16x32xf32> -> vector<16x32xf32>
    %c0_23 = arith.constant 0 : index
    %c0_24 = arith.constant 0 : index
    %c0_25 = arith.constant 0 : index
    %40 = vector.load %arg7[%c0_23, %c0_24, %c0_25] : memref<1x1x32xf32, #tpu.memory_space<vmem>>, vector<1x1x32xf32>
    %41 = vector.shape_cast %40 : vector<1x1x32xf32> to vector<1x32xf32>
    %42 = vector.broadcast %41 : vector<1x32xf32> to vector<16x32xf32>
    %43 = arith.addf %39, %42 : vector<16x32xf32>
    %c0_26 = arith.constant 0 : index
    %c0_27 = arith.constant 0 : index
    %c0_28 = arith.constant 0 : index
    %44 = vector.load %arg8[%c0_26, %c0_27, %c0_28] : memref<1x32x32xf32, #tpu.memory_space<vmem>>, vector<1x32x32xf32>
    %45 = vector.shape_cast %44 : vector<1x32x32xf32> to vector<32x32xf32>
    %cst_29 = arith.constant dense<0.000000e+00> : vector<16x32xf32>
    %46 = tpu.matmul %29, %45, %cst_29 {dimension_numbers = #tpu.dot_dimension_numbers<[1], [0], [0], [1], [0, 0, 1, 1], [], []>} : vector<16x32xf32>, vector<32x32xf32>, vector<16x32xf32> -> vector<16x32xf32>
    %c0_30 = arith.constant 0 : index
    %c0_31 = arith.constant 0 : index
    %c0_32 = arith.constant 0 : index
    %47 = vector.load %arg9[%c0_30, %c0_31, %c0_32] : memref<1x1x32xf32, #tpu.memory_space<vmem>>, vector<1x1x32xf32>
    %48 = vector.shape_cast %47 : vector<1x1x32xf32> to vector<1x32xf32>
    %49 = vector.broadcast %48 : vector<1x32xf32> to vector<16x32xf32>
    %50 = arith.addf %46, %49 : vector<16x32xf32>
    %c0_33 = arith.constant 0 : index
    %c0_34 = arith.constant 0 : index
    %c0_35 = arith.constant 0 : index
    %51 = vector.load %arg22[%c0_33, %c0_34, %c0_35] : memref<1x16x32xf32, #tpu.memory_space<vmem>>, vector<1x16x32xf32>
    %52 = vector.shape_cast %51 : vector<1x16x32xf32> to vector<16x32xf32>
    %53 = vector.shape_cast %43 : vector<16x32xf32> to vector<1x16x32xf32>
    tpu.vector_store %arg22[%c0_33, %c0_34, %c0_35], %53 {strides = array<i32>} : memref<1x16x32xf32, #tpu.memory_space<vmem>>, vector<1x16x32xf32>,
    %c0_36 = arith.constant 0 : index
    %c0_37 = arith.constant 0 : index
    %c0_38 = arith.constant 0 : index
    %54 = vector.load %arg23[%c0_36, %c0_37, %c0_38] : memref<1x16x32xf32, #tpu.memory_space<vmem>>, vector<1x16x32xf32>
    %55 = vector.shape_cast %54 : vector<1x16x32xf32> to vector<16x32xf32>
    %56 = vector.shape_cast %50 : vector<16x32xf32> to vector<1x16x32xf32>
    tpu.vector_store %arg23[%c0_36, %c0_37, %c0_38], %56 {strides = array<i32>} : memref<1x16x32xf32, #tpu.memory_space<vmem>>, vector<1x16x32xf32>,
    %57 = vector.shape_cast %36 : vector<16x32xf32> to vector<2x8x32xf32>
    %58 = vector.extract_strided_slice %57 {offsets = [0, 0, 0], sizes = [2, 8, 8], strides = [1, 1, 1]} : vector<2x8x32xf32> to vector<2x8x8xf32>
    %59 = vector.extract_strided_slice %57 {offsets = [0, 0, 8], sizes = [2, 8, 8], strides = [1, 1, 1]} : vector<2x8x32xf32> to vector<2x8x8xf32>
    %60 = vector.extract_strided_slice %57 {offsets = [0, 0, 16], sizes = [2, 8, 8], strides = [1, 1, 1]} : vector<2x8x32xf32> to vector<2x8x8xf32>
    %61 = vector.extract_strided_slice %57 {offsets = [0, 0, 24], sizes = [2, 8, 8], strides = [1, 1, 1]} : vector<2x8x32xf32> to vector<2x8x8xf32>
    %62 = vector.shape_cast %58 : vector<2x8x8xf32> to vector<1x2x8x8xf32>
    %63 = vector.shape_cast %59 : vector<2x8x8xf32> to vector<1x2x8x8xf32>
    %64 = vector.shape_cast %60 : vector<2x8x8xf32> to vector<1x2x8x8xf32>
    %65 = vector.shape_cast %61 : vector<2x8x8xf32> to vector<1x2x8x8xf32>
    %66 = tpu.concatenate %62, %63, %64, %65 in 0 : vector<1x2x8x8xf32>, vector<1x2x8x8xf32>, vector<1x2x8x8xf32>, vector<1x2x8x8xf32> -> vector<4x2x8x8xf32>
    %67 = vector.shape_cast %66 : vector<4x2x8x8xf32> to vector<8x8x8xf32>
    %68 = vector.shape_cast %43 : vector<16x32xf32> to vector<2x8x32xf32>
    %69 = vector.extract_strided_slice %68 {offsets = [0, 0, 0], sizes = [2, 8, 8], strides = [1, 1, 1]} : vector<2x8x32xf32> to vector<2x8x8xf32>
    %70 = vector.extract_strided_slice %68 {offsets = [0, 0, 8], sizes = [2, 8, 8], strides = [1, 1, 1]} : vector<2x8x32xf32> to vector<2x8x8xf32>
    %71 = vector.extract_strided_slice %68 {offsets = [0, 0, 16], sizes = [2, 8, 8], strides = [1, 1, 1]} : vector<2x8x32xf32> to vector<2x8x8xf32>
    %72 = vector.extract_strided_slice %68 {offsets = [0, 0, 24], sizes = [2, 8, 8], strides = [1, 1, 1]} : vector<2x8x32xf32> to vector<2x8x8xf32>
    %73 = vector.shape_cast %69 : vector<2x8x8xf32> to vector<1x2x8x8xf32>
    %74 = vector.shape_cast %70 : vector<2x8x8xf32> to vector<1x2x8x8xf32>
    %75 = vector.shape_cast %71 : vector<2x8x8xf32> to vector<1x2x8x8xf32>
    %76 = vector.shape_cast %72 : vector<2x8x8xf32> to vector<1x2x8x8xf32>
    %77 = tpu.concatenate %73, %74, %75, %76 in 0 : vector<1x2x8x8xf32>, vector<1x2x8x8xf32>, vector<1x2x8x8xf32>, vector<1x2x8x8xf32> -> vector<4x2x8x8xf32>
    %78 = vector.shape_cast %77 : vector<4x2x8x8xf32> to vector<8x8x8xf32>
    %79 = vector.shape_cast %50 : vector<16x32xf32> to vector<2x8x32xf32>
    %80 = vector.extract_strided_slice %79 {offsets = [0, 0, 0], sizes = [2, 8, 8], strides = [1, 1, 1]} : vector<2x8x32xf32> to vector<2x8x8xf32>
    %81 = vector.extract_strided_slice %79 {offsets = [0, 0, 8], sizes = [2, 8, 8], strides = [1, 1, 1]} : vector<2x8x32xf32> to vector<2x8x8xf32>
    %82 = vector.extract_strided_slice %79 {offsets = [0, 0, 16], sizes = [2, 8, 8], strides = [1, 1, 1]} : vector<2x8x32xf32> to vector<2x8x8xf32>
    %83 = vector.extract_strided_slice %79 {offsets = [0, 0, 24], sizes = [2, 8, 8], strides = [1, 1, 1]} : vector<2x8x32xf32> to vector<2x8x8xf32>
    %84 = vector.shape_cast %80 : vector<2x8x8xf32> to vector<1x2x8x8xf32>
    %85 = vector.shape_cast %81 : vector<2x8x8xf32> to vector<1x2x8x8xf32>
    %86 = vector.shape_cast %82 : vector<2x8x8xf32> to vector<1x2x8x8xf32>
    %87 = vector.shape_cast %83 : vector<2x8x8xf32> to vector<1x2x8x8xf32>
    %88 = tpu.concatenate %84, %85, %86, %87 in 0 : vector<1x2x8x8xf32>, vector<1x2x8x8xf32>, vector<1x2x8x8xf32>, vector<1x2x8x8xf32> -> vector<4x2x8x8xf32>
    %89 = vector.shape_cast %88 : vector<4x2x8x8xf32> to vector<8x8x8xf32>
    %cst_39 = arith.constant dense<0.000000e+00> : vector<8x8x8xf32>
    %90 = tpu.matmul %67, %78, %cst_39 {dimension_numbers = #tpu.dot_dimension_numbers<[2], [2], [1], [1], [0, 0, 0, 1, 1, 1], [0], [0]>} : vector<8x8x8xf32>, vector<8x8x8xf32>, vector<8x8x8xf32> -> vector<8x8x8xf32>
    %cst_40 = arith.constant 0.353553385 : f32
    %91 = vector.broadcast %cst_40 : f32 to vector<8x8x8xf32>
    %92 = arith.mulf %90, %91 : vector<8x8x8xf32>
    %93 = tpu.iota {dimensions = array<i32: 0>} : vector<8x8xi32>
    %94 = tpu.iota {dimensions = array<i32: 1>} : vector<8x8xi32>
    %95 = arith.cmpi sle, %94, %93 : vector<8x8xi32>
    %96 = vector.shape_cast %95 : vector<8x8xi1> to vector<1x8x8xi1>
    %cst_41 = arith.constant -3.40282347E+38 : f32
    %97 = vector.shape_cast %96 : vector<1x8x8xi1> to vector<1x8x8xi1>
    %98 = vector.broadcast %97 : vector<1x8x8xi1> to vector<8x8x8xi1>
    %99 = vector.broadcast %cst_41 : f32 to vector<8x8x8xf32>
    %100 = arith.select %98, %92, %99 : vector<8x8x8xi1>, vector<8x8x8xf32>
    %cst_42 = arith.constant dense<0xFF800000> : vector<8x8xf32>
    %101 = vector.multi_reduction <maximumf>, %100, %cst_42 [2] : vector<8x8x8xf32> to vector<8x8xf32>
    %102 = vector.shape_cast %101 : vector<8x8xf32> to vector<8x8x1xf32>
    %103 = vector.broadcast %102 : vector<8x8x1xf32> to vector<8x8x8xf32>
    %104 = arith.subf %100, %103 : vector<8x8x8xf32>
    %105 = math.exp %104 : vector<8x8x8xf32>
    %cst_43 = arith.constant dense<0.000000e+00> : vector<8x8xf32>
    %106 = vector.multi_reduction <add>, %105, %cst_43 [2] : vector<8x8x8xf32> to vector<8x8xf32>
    %107 = vector.shape_cast %106 : vector<8x8xf32> to vector<8x8x1xf32>
    %108 = vector.broadcast %107 : vector<8x8x1xf32> to vector<8x8x8xf32>
    %109 = arith.divf %105, %108 : vector<8x8x8xf32>
    %cst_44 = arith.constant dense<0.000000e+00> : vector<8x8x8xf32>
    %110 = tpu.matmul %109, %89, %cst_44 {dimension_numbers = #tpu.dot_dimension_numbers<[2], [1], [1], [2], [0, 0, 0, 1, 1, 2], [0], [0]>} : vector<8x8x8xf32>, vector<8x8x8xf32>, vector<8x8x8xf32> -> vector<8x8x8xf32>
    %111 = vector.extract_strided_slice %110 {offsets = [0, 0, 0], sizes = [1, 8, 8], strides = [1, 1, 1]} : vector<8x8x8xf32> to vector<1x8x8xf32>
    %112 = vector.shape_cast %111 : vector<1x8x8xf32> to vector<8x8xf32>
    %113 = vector.extract_strided_slice %110 {offsets = [2, 0, 0], sizes = [1, 8, 8], strides = [1, 1, 1]} : vector<8x8x8xf32> to vector<1x8x8xf32>
    %114 = vector.shape_cast %113 : vector<1x8x8xf32> to vector<8x8xf32>
    %115 = vector.extract_strided_slice %110 {offsets = [4, 0, 0], sizes = [1, 8, 8], strides = [1, 1, 1]} : vector<8x8x8xf32> to vector<1x8x8xf32>
    %116 = vector.shape_cast %115 : vector<1x8x8xf32> to vector<8x8xf32>
    %117 = vector.extract_strided_slice %110 {offsets = [6, 0, 0], sizes = [1, 8, 8], strides = [1, 1, 1]} : vector<8x8x8xf32> to vector<1x8x8xf32>
    %118 = vector.shape_cast %117 : vector<1x8x8xf32> to vector<8x8xf32>
    %119 = tpu.concatenate %112, %114, %116, %118 in 1 : vector<8x8xf32>, vector<8x8xf32>, vector<8x8xf32>, vector<8x8xf32> -> vector<8x32xf32>
    %120 = vector.extract_strided_slice %110 {offsets = [1, 0, 0], sizes = [1, 8, 8], strides = [1, 1, 1]} : vector<8x8x8xf32> to vector<1x8x8xf32>
    %121 = vector.shape_cast %120 : vector<1x8x8xf32> to vector<8x8xf32>
    %122 = vector.extract_strided_slice %110 {offsets = [3, 0, 0], sizes = [1, 8, 8], strides = [1, 1, 1]} : vector<8x8x8xf32> to vector<1x8x8xf32>
    %123 = vector.shape_cast %122 : vector<1x8x8xf32> to vector<8x8xf32>
    %124 = vector.extract_strided_slice %110 {offsets = [5, 0, 0], sizes = [1, 8, 8], strides = [1, 1, 1]} : vector<8x8x8xf32> to vector<1x8x8xf32>
    %125 = vector.shape_cast %124 : vector<1x8x8xf32> to vector<8x8xf32>
    %126 = vector.extract_strided_slice %110 {offsets = [7, 0, 0], sizes = [1, 8, 8], strides = [1, 1, 1]} : vector<8x8x8xf32> to vector<1x8x8xf32>
    %127 = vector.shape_cast %126 : vector<1x8x8xf32> to vector<8x8xf32>
    %128 = tpu.concatenate %121, %123, %125, %127 in 1 : vector<8x8xf32>, vector<8x8xf32>, vector<8x8xf32>, vector<8x8xf32> -> vector<8x32xf32>
    %129 = tpu.concatenate %119, %128 in 0 : vector<8x32xf32>, vector<8x32xf32> -> vector<16x32xf32>
    %c0_45 = arith.constant 0 : index
    %c0_46 = arith.constant 0 : index
    %c0_47 = arith.constant 0 : index
    %130 = vector.load %arg10[%c0_45, %c0_46, %c0_47] : memref<1x32x32xf32, #tpu.memory_space<vmem>>, vector<1x32x32xf32>
    %131 = vector.shape_cast %130 : vector<1x32x32xf32> to vector<32x32xf32>
    %cst_48 = arith.constant dense<0.000000e+00> : vector<16x32xf32>
    %132 = tpu.matmul %129, %131, %cst_48 {dimension_numbers = #tpu.dot_dimension_numbers<[1], [0], [0], [1], [0, 0, 1, 1], [], []>} : vector<16x32xf32>, vector<32x32xf32>, vector<16x32xf32> -> vector<16x32xf32>
    %133 = arith.addf %3, %132 : vector<16x32xf32>
    %c0_49 = arith.constant 0 : index
    %c0_50 = arith.constant 0 : index
    %c0_51 = arith.constant 0 : index
    %134 = vector.load %arg11[%c0_49, %c0_50, %c0_51] : memref<1x1x32xf32, #tpu.memory_space<vmem>>, vector<1x1x32xf32>
    %135 = vector.shape_cast %134 : vector<1x1x32xf32> to vector<1x32xf32>
    %136 = vector.broadcast %135 : vector<1x32xf32> to vector<16x32xf32>
    %137 = arith.addf %133, %136 : vector<16x32xf32>
    %c0_52 = arith.constant 0 : index
    %c0_53 = arith.constant 0 : index
    %c0_54 = arith.constant 0 : index
    %138 = vector.load %arg12[%c0_52, %c0_53, %c0_54] : memref<1x1x32xf32, #tpu.memory_space<vmem>>, vector<1x1x32xf32>
    %139 = vector.shape_cast %138 : vector<1x1x32xf32> to vector<1x32xf32>
    %c0_55 = arith.constant 0 : index
    %c0_56 = arith.constant 0 : index
    %c0_57 = arith.constant 0 : index
    %140 = vector.load %arg13[%c0_55, %c0_56, %c0_57] : memref<1x1x32xf32, #tpu.memory_space<vmem>>, vector<1x1x32xf32>
    %141 = vector.shape_cast %140 : vector<1x1x32xf32> to vector<1x32xf32>
    %cst_58 = arith.constant dense<0.000000e+00> : vector<16xf32>
    %142 = vector.multi_reduction <add>, %137, %cst_58 [1] : vector<16x32xf32> to vector<16xf32>
    %143 = vector.shape_cast %142 : vector<16xf32> to vector<16x1xf32>
    %cst_59 = arith.constant 3.200000e+01 : f32
    %144 = vector.broadcast %cst_59 : f32 to vector<16x1xf32>
    %145 = arith.divf %143, %144 : vector<16x1xf32>
    %146 = vector.broadcast %145 : vector<16x1xf32> to vector<16x32xf32>
    %147 = arith.subf %137, %146 : vector<16x32xf32>
    %148 = arith.mulf %147, %147 : vector<16x32xf32>
    %cst_60 = arith.constant dense<0.000000e+00> : vector<16xf32>
    %149 = vector.multi_reduction <add>, %148, %cst_60 [1] : vector<16x32xf32> to vector<16xf32>
    %150 = vector.shape_cast %149 : vector<16xf32> to vector<16x1xf32>
    %cst_61 = arith.constant 3.200000e+01 : f32
    %151 = vector.broadcast %cst_61 : f32 to vector<16x1xf32>
    %152 = arith.divf %150, %151 : vector<16x1xf32>
    %153 = vector.broadcast %145 : vector<16x1xf32> to vector<16x32xf32>
    %154 = arith.subf %137, %153 : vector<16x32xf32>
    %cst_62 = arith.constant 9.99999974E-6 : f32
    %155 = vector.broadcast %cst_62 : f32 to vector<16x1xf32>
    %156 = arith.addf %152, %155 : vector<16x1xf32>
    %157 = math.rsqrt %156 : vector<16x1xf32>
    %158 = vector.broadcast %157 : vector<16x1xf32> to vector<16x32xf32>
    %159 = arith.mulf %154, %158 : vector<16x32xf32>
    %160 = vector.broadcast %139 : vector<1x32xf32> to vector<16x32xf32>
    %161 = arith.mulf %159, %160 : vector<16x32xf32>
    %162 = vector.broadcast %141 : vector<1x32xf32> to vector<16x32xf32>
    %163 = arith.addf %161, %162 : vector<16x32xf32>
    %c0_63 = arith.constant 0 : index
    %c0_64 = arith.constant 0 : index
    %c0_65 = arith.constant 0 : index
    %164 = vector.load %arg14[%c0_63, %c0_64, %c0_65] : memref<1x32x128xf32, #tpu.memory_space<vmem>>, vector<1x32x128xf32>
    %165 = vector.shape_cast %164 : vector<1x32x128xf32> to vector<32x128xf32>
    %cst_66 = arith.constant dense<0.000000e+00> : vector<16x128xf32>
    %166 = tpu.matmul %163, %165, %cst_66 {dimension_numbers = #tpu.dot_dimension_numbers<[1], [0], [0], [1], [0, 0, 1, 1], [], []>} : vector<16x32xf32>, vector<32x128xf32>, vector<16x128xf32> -> vector<16x128xf32>
    %c0_67 = arith.constant 0 : index
    %c0_68 = arith.constant 0 : index
    %c0_69 = arith.constant 0 : index
    %167 = vector.load %arg15[%c0_67, %c0_68, %c0_69] : memref<1x1x128xf32, #tpu.memory_space<vmem>>, vector<1x1x128xf32>
    %168 = vector.shape_cast %167 : vector<1x1x128xf32> to vector<1x128xf32>
    %169 = vector.broadcast %168 : vector<1x128xf32> to vector<16x128xf32>
    %170 = arith.addf %166, %169 : vector<16x128xf32>
    %cst_70 = arith.constant 5.000000e-01 : f32
    %171 = vector.broadcast %cst_70 : f32 to vector<16x128xf32>
    %172 = arith.mulf %171, %170 : vector<16x128xf32>
    %cst_71 = arith.constant 4.471500e-02 : f32
    %173 = vector.broadcast %cst_71 : f32 to vector<16x128xf32>
    %174 = arith.mulf %173, %170 : vector<16x128xf32>
    %175 = arith.mulf %174, %170 : vector<16x128xf32>
    %176 = arith.mulf %175, %170 : vector<16x128xf32>
    %177 = arith.addf %170, %176 : vector<16x128xf32>
    %cst_72 = arith.constant 0.797884583 : f32
    %178 = vector.broadcast %cst_72 : f32 to vector<16x128xf32>
    %179 = arith.mulf %178, %177 : vector<16x128xf32>
    %180 = math.tanh %179 : vector<16x128xf32>
    %cst_73 = arith.constant 1.000000e+00 : f32
    %181 = vector.broadcast %cst_73 : f32 to vector<16x128xf32>
    %182 = arith.addf %181, %180 : vector<16x128xf32>
    %183 = arith.mulf %172, %182 : vector<16x128xf32>
    %c0_74 = arith.constant 0 : index
    %c0_75 = arith.constant 0 : index
    %c0_76 = arith.constant 0 : index
    %184 = vector.load %arg16[%c0_74, %c0_75, %c0_76] : memref<1x128x32xf32, #tpu.memory_space<vmem>>, vector<1x128x32xf32>
    %185 = vector.shape_cast %184 : vector<1x128x32xf32> to vector<128x32xf32>
    %cst_77 = arith.constant dense<0.000000e+00> : vector<16x32xf32>
    %186 = tpu.matmul %183, %185, %cst_77 {dimension_numbers = #tpu.dot_dimension_numbers<[1], [0], [0], [1], [0, 0, 1, 1], [], []>} : vector<16x128xf32>, vector<128x32xf32>, vector<16x32xf32> -> vector<16x32xf32>
    %c0_78 = arith.constant 0 : index
    %c0_79 = arith.constant 0 : index
    %c0_80 = arith.constant 0 : index
    %187 = vector.load %arg17[%c0_78, %c0_79, %c0_80] : memref<1x1x32xf32, #tpu.memory_space<vmem>>, vector<1x1x32xf32>
    %188 = vector.shape_cast %187 : vector<1x1x32xf32> to vector<1x32xf32>
    %189 = vector.broadcast %188 : vector<1x32xf32> to vector<16x32xf32>
    %190 = arith.addf %186, %189 : vector<16x32xf32>
    %191 = arith.addf %137, %190 : vector<16x32xf32>
    %c0_81 = arith.constant 0 : index
    %c0_82 = arith.constant 0 : index
    %192 = vector.load %arg24[%c0_81, %c0_82] : memref<16x32xf32, #tpu.memory_space<vmem>>, vector<16x32xf32>
    tpu.vector_store %arg24[%c0_81, %c0_82], %191 {strides = array<i32>} : memref<16x32xf32, #tpu.memory_space<vmem>>, vector<16x32xf32>,
    %c1_i32 = arith.constant 1 : i32
    %193 = arith.cmpi eq, %arg0, %c1_i32 : i32
    %194 = arith.extui %193 : i1 to i32
    %c0_i32_83 = arith.constant 0 : i32
    %195 = arith.cmpi ne, %194, %c0_i32_83 : i32
    scf.if %195 {
      %c0_84 = arith.constant 0 : index
      %c0_85 = arith.constant 0 : index
      %196 = vector.load %arg24[%c0_84, %c0_85] : memref<16x32xf32, #tpu.memory_space<vmem>>, vector<16x32xf32>
      %c0_86 = arith.constant 0 : index
      %c0_87 = arith.constant 0 : index
      %197 = vector.load %arg18[%c0_86, %c0_87] : memref<1x32xf32, #tpu.memory_space<vmem>>, vector<1x32xf32>
      %c0_88 = arith.constant 0 : index
      %c0_89 = arith.constant 0 : index
      %198 = vector.load %arg19[%c0_88, %c0_89] : memref<1x32xf32, #tpu.memory_space<vmem>>, vector<1x32xf32>
      %cst_90 = arith.constant dense<0.000000e+00> : vector<16xf32>
      %199 = vector.multi_reduction <add>, %196, %cst_90 [1] : vector<16x32xf32> to vector<16xf32>
      %200 = vector.shape_cast %199 : vector<16xf32> to vector<16x1xf32>
      %cst_91 = arith.constant 3.200000e+01 : f32
      %201 = vector.broadcast %cst_91 : f32 to vector<16x1xf32>
      %202 = arith.divf %200, %201 : vector<16x1xf32>
      %203 = vector.broadcast %202 : vector<16x1xf32> to vector<16x32xf32>
      %204 = arith.subf %196, %203 : vector<16x32xf32>
      %205 = arith.mulf %204, %204 : vector<16x32xf32>
      %cst_92 = arith.constant dense<0.000000e+00> : vector<16xf32>
      %206 = vector.multi_reduction <add>, %205, %cst_92 [1] : vector<16x32xf32> to vector<16xf32>
      %207 = vector.shape_cast %206 : vector<16xf32> to vector<16x1xf32>
      %cst_93 = arith.constant 3.200000e+01 : f32
      %208 = vector.broadcast %cst_93 : f32 to vector<16x1xf32>
      %209 = arith.divf %207, %208 : vector<16x1xf32>
      %210 = vector.broadcast %202 : vector<16x1xf32> to vector<16x32xf32>
      %211 = arith.subf %196, %210 : vector<16x32xf32>
      %cst_94 = arith.constant 9.99999974E-6 : f32
      %212 = vector.broadcast %cst_94 : f32 to vector<16x1xf32>
      %213 = arith.addf %209, %212 : vector<16x1xf32>
      %214 = math.rsqrt %213 : vector<16x1xf32>
      %215 = vector.broadcast %214 : vector<16x1xf32> to vector<16x32xf32>
      %216 = arith.mulf %211, %215 : vector<16x32xf32>
      %217 = vector.broadcast %197 : vector<1x32xf32> to vector<16x32xf32>
      %218 = arith.mulf %216, %217 : vector<16x32xf32>
      %219 = vector.broadcast %198 : vector<1x32xf32> to vector<16x32xf32>
      %220 = arith.addf %218, %219 : vector<16x32xf32>
      %c0_95 = arith.constant 0 : index
      %c0_96 = arith.constant 0 : index
      %221 = vector.load %arg20[%c0_95, %c0_96] : memref<128x32xf32, #tpu.memory_space<vmem>>, vector<128x32xf32>
      %cst_97 = arith.constant dense<0.000000e+00> : vector<16x128xf32>
      %222 = tpu.matmul %220, %221, %cst_97 {dimension_numbers = #tpu.dot_dimension_numbers<[1], [1], [0], [0], [0, 0, 1, 0], [], []>} : vector<16x32xf32>, vector<128x32xf32>, vector<16x128xf32> -> vector<16x128xf32>
      %c0_98 = arith.constant 0 : index
      %c0_99 = arith.constant 0 : index
      %223 = vector.load %arg21[%c0_98, %c0_99] : memref<16x128xf32, #tpu.memory_space<vmem>>, vector<16x128xf32>
      tpu.vector_store %arg21[%c0_98, %c0_99], %222 {strides = array<i32>} : memref<16x128xf32, #tpu.memory_space<vmem>>, vector<16x128xf32>,
    } else {
    }
    return
  }
  func.func @transform_0(%arg0: i32) -> (i32, i32) {
    %c0_i32 = arith.constant 0 : i32
    %c0_i32_0 = arith.constant 0 : i32
    %c0_i32_1 = arith.constant 0 : i32
    return %c0_i32, %c0_i32_0 : i32, i32
  }
  func.func @transform_1(%arg0: i32) -> (i32, i32, i32) {
    %c0_i32 = arith.constant 0 : i32
    %c0_i32_0 = arith.constant 0 : i32
    %c0_i32_1 = arith.constant 0 : i32
    return %arg0, %c0_i32, %c0_i32_0 : i32, i32, i32
  }
  func.func @transform_2(%arg0: i32) -> (i32, i32, i32) {
    %c0_i32 = arith.constant 0 : i32
    %c0_i32_0 = arith.constant 0 : i32
    %c0_i32_1 = arith.constant 0 : i32
    return %arg0, %c0_i32, %c0_i32_0 : i32, i32, i32
  }
  func.func @transform_3(%arg0: i32) -> (i32, i32, i32) {
    %c0_i32 = arith.constant 0 : i32
    %c0_i32_0 = arith.constant 0 : i32
    %c0_i32_1 = arith.constant 0 : i32
    return %arg0, %c0_i32, %c0_i32_0 : i32, i32, i32
  }
  func.func @transform_4(%arg0: i32) -> (i32, i32, i32) {
    %c0_i32 = arith.constant 0 : i32
    %c0_i32_0 = arith.constant 0 : i32
    %c0_i32_1 = arith.constant 0 : i32
    return %arg0, %c0_i32, %c0_i32_0 : i32, i32, i32
  }
  func.func @transform_5(%arg0: i32) -> (i32, i32, i32) {
    %c0_i32 = arith.constant 0 : i32
    %c0_i32_0 = arith.constant 0 : i32
    %c0_i32_1 = arith.constant 0 : i32
    return %arg0, %c0_i32, %c0_i32_0 : i32, i32, i32
  }
  func.func @transform_6(%arg0: i32) -> (i32, i32, i32) {
    %c0_i32 = arith.constant 0 : i32
    %c0_i32_0 = arith.constant 0 : i32
    %c0_i32_1 = arith.constant 0 : i32
    return %arg0, %c0_i32, %c0_i32_0 : i32, i32, i32
  }
  func.func @transform_7(%arg0: i32) -> (i32, i32, i32) {
    %c0_i32 = arith.constant 0 : i32
    %c0_i32_0 = arith.constant 0 : i32
    %c0_i32_1 = arith.constant 0 : i32
    return %arg0, %c0_i32, %c0_i32_0 : i32, i32, i32
  }
  func.func @transform_8(%arg0: i32) -> (i32, i32, i32) {
    %c0_i32 = arith.constant 0 : i32
    %c0_i32_0 = arith.constant 0 : i32
    %c0_i32_1 = arith.constant 0 : i32
    return %arg0, %c0_i32, %c0_i32_0 : i32, i32, i32
  }
  func.func @transform_9(%arg0: i32) -> (i32, i32, i32) {
    %c0_i32 = arith.constant 0 : i32
    %c0_i32_0 = arith.constant 0 : i32
    %c0_i32_1 = arith.constant 0 : i32
    return %arg0, %c0_i32, %c0_i32_0 : i32, i32, i32
  }
  func.func @transform_10(%arg0: i32) -> (i32, i32, i32) {
    %c0_i32 = arith.constant 0 : i32
    %c0_i32_0 = arith.constant 0 : i32
    %c0_i32_1 = arith.constant 0 : i32
    return %arg0, %c0_i32, %c0_i32_0 : i32, i32, i32
  }
  func.func @transform_11(%arg0: i32) -> (i32, i32, i32) {
    %c0_i32 = arith.constant 0 : i32
    %c0_i32_0 = arith.constant 0 : i32
    %c0_i32_1 = arith.constant 0 : i32
    return %arg0, %c0_i32, %c0_i32_0 : i32, i32, i32
  }
  func.func @transform_12(%arg0: i32) -> (i32, i32, i32) {
    %c0_i32 = arith.constant 0 : i32
    %c0_i32_0 = arith.constant 0 : i32
    %c0_i32_1 = arith.constant 0 : i32
    return %arg0, %c0_i32, %c0_i32_0 : i32, i32, i32
  }
  func.func @transform_13(%arg0: i32) -> (i32, i32, i32) {
    %c0_i32 = arith.constant 0 : i32
    %c0_i32_0 = arith.constant 0 : i32
    %c0_i32_1 = arith.constant 0 : i32
    return %arg0, %c0_i32, %c0_i32_0 : i32, i32, i32
  }
  func.func @transform_14(%arg0: i32) -> (i32, i32, i32) {
    %c0_i32 = arith.constant 0 : i32
    %c0_i32_0 = arith.constant 0 : i32
    %c0_i32_1 = arith.constant 0 : i32
    return %arg0, %c0_i32, %c0_i32_0 : i32, i32, i32
  }
  func.func @transform_15(%arg0: i32) -> (i32, i32, i32) {
    %c0_i32 = arith.constant 0 : i32
    %c0_i32_0 = arith.constant 0 : i32
    %c0_i32_1 = arith.constant 0 : i32
    return %arg0, %c0_i32, %c0_i32_0 : i32, i32, i32
  }
  func.func @transform_16(%arg0: i32) -> (i32, i32, i32) {
    %c0_i32 = arith.constant 0 : i32
    %c0_i32_0 = arith.constant 0 : i32
    %c0_i32_1 = arith.constant 0 : i32
    return %arg0, %c0_i32, %c0_i32_0 : i32, i32, i32
  }
  func.func @transform_17(%arg0: i32) -> (i32, i32) {
    %c0_i32 = arith.constant 0 : i32
    %c0_i32_0 = arith.constant 0 : i32
    %c0_i32_1 = arith.constant 0 : i32
    return %c0_i32, %c0_i32_0 : i32, i32
  }
  func.func @transform_18(%arg0: i32) -> (i32, i32) {
    %c0_i32 = arith.constant 0 : i32
    %c0_i32_0 = arith.constant 0 : i32
    %c0_i32_1 = arith.constant 0 : i32
    return %c0_i32, %c0_i32_0 : i32, i32
  }
  func.func @transform_19(%arg0: i32) -> (i32, i32) {
    %c0_i32 = arith.constant 0 : i32
    %c0_i32_0 = arith.constant 0 : i32
    %c0_i32_1 = arith.constant 0 : i32
    return %c0_i32, %c0_i32_0 : i32, i32
  }
  func.func @transform_20(%arg0: i32) -> (i32, i32) {
    %c0_i32 = arith.constant 0 : i32
    %c0_i32_0 = arith.constant 0 : i32
    %c0_i32_1 = arith.constant 0 : i32
    return %c0_i32, %c0_i32_0 : i32, i32
  }
  func.func @transform_21(%arg0: i32) -> (i32, i32, i32) {
    %c0_i32 = arith.constant 0 : i32
    %c0_i32_0 = arith.constant 0 : i32
    %c0_i32_1 = arith.constant 0 : i32
    return %arg0, %c0_i32, %c0_i32_0 : i32, i32, i32
  }
  func.func @transform_22(%arg0: i32) -> (i32, i32, i32) {
    %c0_i32 = arith.constant 0 : i32
    %c0_i32_0 = arith.constant 0 : i32
    %c0_i32_1 = arith.constant 0 : i32
    return %arg0, %c0_i32, %c0_i32_0 : i32, i32, i32
  }
}

</mosaic_0001>

<llo_original>
// kernel: squeeze.7
$region0: #{squeeze.7}
  %s0 = inlined_call_operand.vmem [shape: f32[1,16,32], index: 0, kind: input, shape index: {}]
  %s1 = inlined_call_operand.vmem [shape: f32[2,8,4,8], index: 1, kind: output, shape index: {}]
  $region1: #{squeeze.7} parent=0
    #allocation0 [shape = 'u8[65536]{0}', space=vmem, size = 0x10000, scoped, tag = 'scoped mem for output reshape']
    %v2 = vld [vmem:[%s0] sm:$0xff]
    %vm3 = vcmask 64512
    %4 = vst.msk [vmem:[#allocation0] ss:$8 sm:$0xf] %vm3, %v2
    %5 = vst.msk [vmem:[#allocation0] ss:$8 sm:$0xf0] %vm3, %v2
    %s6 = scalar_lea.vmem %s0, 8
    %v7 = vld [vmem:[%s6] sm:$0xff]
    %vm8 = vcmask 64512
    %s9 = scalar_lea.vmem [#allocation0], 64
    %10 = vst.msk [vmem:[%s9] ss:$8 sm:$0xf] %vm8, %v7
    %s11 = scalar_lea.vmem [#allocation0], 64
    %12 = vst.msk [vmem:[%s11] ss:$8 sm:$0xf0] %vm8, %v7
    %v13 = vld [vmem:[%s0] sm:$0xff]
    %14 = vrot.lane.b32.xlu0 %v13, 120
    %v15 = vpop.permute.xlu0 %14
    %vm16 = vcmask 64512
    %s17 = scalar_lea.vmem [#allocation0], 1
    %18 = vst.msk [vmem:[%s17] ss:$8 sm:$0xf] %vm16, %v15
    %s19 = scalar_lea.vmem [#allocation0], 1
    %20 = vst.msk [vmem:[%s19] ss:$8 sm:$0xf0] %vm16, %v15
    %s21 = scalar_lea.vmem %s0, 8
    %v22 = vld [vmem:[%s21] sm:$0xff]
    %23 = vrot.lane.b32.xlu0 %v22, 120
    %v24 = vpop.permute.xlu0 %23
    %vm25 = vcmask 64512
    %s26 = scalar_lea.vmem [#allocation0], 65
    %27 = vst.msk [vmem:[%s26] ss:$8 sm:$0xf] %vm25, %v24
    %s28 = scalar_lea.vmem [#allocation0], 65
    %29 = vst.msk [vmem:[%s28] ss:$8 sm:$0xf0] %vm25, %v24
    %v30 = vld [vmem:[%s0] sm:$0xff]
    %31 = vrot.lane.b32.xlu0 %v30, 112
    %v32 = vpop.permute.xlu0 %31
    %vm33 = vcmask 64512
    %s34 = scalar_lea.vmem [#allocation0], 2
    %35 = vst.msk [vmem:[%s34] ss:$8 sm:$0xf] %vm33, %v32
    %s36 = scalar_lea.vmem [#allocation0], 2
    %37 = vst.msk [vmem:[%s36] ss:$8 sm:$0xf0] %vm33, %v32
    %s38 = scalar_lea.vmem %s0, 8
    %v39 = vld [vmem:[%s38] sm:$0xff]
    %40 = vrot.lane.b32.xlu0 %v39, 112
    %v41 = vpop.permute.xlu0 %40
    %vm42 = vcmask 64512
    %s43 = scalar_lea.vmem [#allocation0], 66
    %44 = vst.msk [vmem:[%s43] ss:$8 sm:$0xf] %vm42, %v41
    %s45 = scalar_lea.vmem [#allocation0], 66
    %46 = vst.msk [vmem:[%s45] ss:$8 sm:$0xf0] %vm42, %v41
    %v47 = vld [vmem:[%s0] sm:$0xff]
    %48 = vrot.lane.b32.xlu0 %v47, 104
    %v49 = vpop.permute.xlu0 %48
    %vm50 = vcmask 64512
    %s51 = scalar_lea.vmem [#allocation0], 3
    %52 = vst.msk [vmem:[%s51] ss:$8 sm:$0xf] %vm50, %v49
    %s53 = scalar_lea.vmem [#allocation0], 3
    %54 = vst.msk [vmem:[%s53] ss:$8 sm:$0xf0] %vm50, %v49
    %s55 = scalar_lea.vmem %s0, 8
    %v56 = vld [vmem:[%s55] sm:$0xff]
    %57 = vrot.lane.b32.xlu0 %v56, 104
    %v58 = vpop.permute.xlu0 %57
    %vm59 = vcmask 64512
    %s60 = scalar_lea.vmem [#allocation0], 67
    %61 = vst.msk [vmem:[%s60] ss:$8 sm:$0xf] %vm59, %v58
    %s62 = scalar_lea.vmem [#allocation0], 67
    %63 = vst.msk [vmem:[%s62] ss:$8 sm:$0xf0] %vm59, %v58
    %s65 = ssub.s32 16, 1
    %v66 = vld [vmem:[#allocation0] sm:%s65]
    %s68 = ssub.s32 16, 1
    %69 = vst [vmem:[%s1] sm:%s68] %v66
    %s70 = scalar_lea.vmem [#allocation0], 8
    %v71 = vld [vmem:[%s70] sm:%s65]
    %s73 = ssub.s32 16, 1
    %s74 = scalar_lea.vmem %s1, 4
    %75 = vst [vmem:[%s74] sm:%s73] %v71
    %s76 = scalar_lea.vmem [#allocation0], 16
    %v77 = vld [vmem:[%s76] sm:%s65]
    %s79 = ssub.s32 16, 1
    %s80 = scalar_lea.vmem %s1, 8
    %81 = vst [vmem:[%s80] sm:%s79] %v77
    %s82 = scalar_lea.vmem [#allocation0], 24
    %v83 = vld [vmem:[%s82] sm:%s65]
    %s85 = ssub.s32 16, 1
    %s86 = scalar_lea.vmem %s1, 12
    %87 = vst [vmem:[%s86] sm:%s85] %v83
    %s88 = scalar_lea.vmem [#allocation0], 32
    %v89 = vld [vmem:[%s88] sm:%s65]
    %s91 = ssub.s32 16, 1
    %s92 = scalar_lea.vmem %s1, 16
    %93 = vst [vmem:[%s92] sm:%s91] %v89
    %s94 = scalar_lea.vmem [#allocation0], 40
    %v95 = vld [vmem:[%s94] sm:%s65]
    %s97 = ssub.s32 16, 1
    %s98 = scalar_lea.vmem %s1, 20
    %99 = vst [vmem:[%s98] sm:%s97] %v95
    %s100 = scalar_lea.vmem [#allocation0], 48
    %v101 = vld [vmem:[%s100] sm:%s65]
    %s103 = ssub.s32 16, 1
    %s104 = scalar_lea.vmem %s1, 24
    %105 = vst [vmem:[%s104] sm:%s103] %v101
    %s106 = scalar_lea.vmem [#allocation0], 56
    %v107 = vld [vmem:[%s106] sm:%s65]
    %s109 = ssub.s32 16, 1
    %s110 = scalar_lea.vmem %s1, 28
    %111 = vst [vmem:[%s110] sm:%s109] %v107
    %s112 = scalar_lea.vmem [#allocation0], 64
    %v113 = vld [vmem:[%s112] sm:%s65]
    %s115 = ssub.s32 16, 1
    %s116 = scalar_lea.vmem %s1, 32
    %117 = vst [vmem:[%s116] sm:%s115] %v113
    %s118 = scalar_lea.vmem [#allocation0], 72
    %v119 = vld [vmem:[%s118] sm:%s65]
    %s121 = ssub.s32 16, 1
    %s122 = scalar_lea.vmem %s1, 36
    %123 = vst [vmem:[%s122] sm:%s121] %v119
    %s124 = scalar_lea.vmem [#allocation0], 80
    %v125 = vld [vmem:[%s124] sm:%s65]
    %s127 = ssub.s32 16, 1
    %s128 = scalar_lea.vmem %s1, 40
    %129 = vst [vmem:[%s128] sm:%s127] %v125
    %s130 = scalar_lea.vmem [#allocation0], 88
    %v131 = vld [vmem:[%s130] sm:%s65]
    %s133 = ssub.s32 16, 1
    %s134 = scalar_lea.vmem %s1, 44
    %135 = vst [vmem:[%s134] sm:%s133] %v131
    %s136 = scalar_lea.vmem [#allocation0], 96
    %v137 = vld [vmem:[%s136] sm:%s65]
    %s139 = ssub.s32 16, 1
    %s140 = scalar_lea.vmem %s1, 48
    %141 = vst [vmem:[%s140] sm:%s139] %v137
    %s142 = scalar_lea.vmem [#allocation0], 104
    %v143 = vld [vmem:[%s142] sm:%s65]
    %s145 = ssub.s32 16, 1
    %s146 = scalar_lea.vmem %s1, 52
    %147 = vst [vmem:[%s146] sm:%s145] %v143
    %s148 = scalar_lea.vmem [#allocation0], 112
    %v149 = vld [vmem:[%s148] sm:%s65]
    %s151 = ssub.s32 16, 1
    %s152 = scalar_lea.vmem %s1, 56
    %153 = vst [vmem:[%s152] sm:%s151] %v149
    %s154 = scalar_lea.vmem [#allocation0], 120
    %v155 = vld [vmem:[%s154] sm:%s65]
    %s157 = ssub.s32 16, 1
    %s158 = scalar_lea.vmem %s1, 60
    %159 = vst [vmem:[%s158] sm:%s157] %v155

// kernel: gpt2_forward.1
$region0: #{gpt2_forward.1}
  #allocation0 [shape = 'u32[]', space=smem, size = 0x4, offset = 0x4, fixed_abs, tag = 'smem constant byte address 0x4 - core index']
  #allocation1 [shape = 'u32[72,128]{1,0:T(1,128)}', space=vmem, size = 0x9000, scoped, tag = 'internal scratch']
  #allocation2 [shape = 'f32[16,32]{1,0:T(8,128)}', space=vmem, size = 0x2000, scoped, tag = 'scratch operand']
  %s0 = inlined_call_operand.vmem [shape: f32[16,32], index: 0, kind: input, shape index: {}]
  %s1 = inlined_call_operand.vmem [shape: f32[2,1,32], index: 1, kind: input, shape index: {}]
  %s2 = inlined_call_operand.vmem [shape: f32[2,1,32], index: 2, kind: input, shape index: {}]
  %s3 = inlined_call_operand.vmem [shape: f32[2,32,32], index: 3, kind: input, shape index: {}]
  %s4 = inlined_call_operand.vmem [shape: f32[2,1,32], index: 4, kind: input, shape index: {}]
  %s5 = inlined_call_operand.vmem [shape: f32[2,32,32], index: 5, kind: input, shape index: {}]
  %s6 = inlined_call_operand.vmem [shape: f32[2,1,32], index: 6, kind: input, shape index: {}]
  %s7 = inlined_call_operand.vmem [shape: f32[2,32,32], index: 7, kind: input, shape index: {}]
  %s8 = inlined_call_operand.vmem [shape: f32[2,1,32], index: 8, kind: input, shape index: {}]
  %s9 = inlined_call_operand.vmem [shape: f32[2,32,32], index: 9, kind: input, shape index: {}]
  %s10 = inlined_call_operand.vmem [shape: f32[2,1,32], index: 10, kind: input, shape index: {}]
  %s11 = inlined_call_operand.vmem [shape: f32[2,1,32], index: 11, kind: input, shape index: {}]
  %s12 = inlined_call_operand.vmem [shape: f32[2,1,32], index: 12, kind: input, shape index: {}]
  %s13 = inlined_call_operand.vmem [shape: f32[2,32,128], index: 13, kind: input, shape index: {}]
  %s14 = inlined_call_operand.vmem [shape: f32[2,1,128], index: 14, kind: input, shape index: {}]
  %s15 = inlined_call_operand.vmem [shape: f32[2,128,32], index: 15, kind: input, shape index: {}]
  %s16 = inlined_call_operand.vmem [shape: f32[2,1,32], index: 16, kind: input, shape index: {}]
  %s17 = inlined_call_operand.vmem [shape: f32[1,32], index: 17, kind: input, shape index: {}]
  %s18 = inlined_call_operand.vmem [shape: f32[1,32], index: 18, kind: input, shape index: {}]
  %s19 = inlined_call_operand.vmem [shape: f32[128,32], index: 19, kind: input, shape index: {}]
  %s20 = inlined_call_operand.hbm [shape: f32[16,128], index: 20, kind: output, shape index: {0}]
  %s21 = inlined_call_operand.vmem [shape: f32[2,16,32], index: 21, kind: output, shape index: {1}]
  %s22 = inlined_call_operand.vmem [shape: f32[2,16,32], index: 22, kind: output, shape index: {2}]
  %23 = xla_tuple %s20, %s21, %s22
  %s24 = sld [smem:[#allocation0]]
  $region137: #{gpt2_forward.1} parent=0
    _
  %s26 = ssub.s32 1, %s24
  %s27 = scalar_select 0, %s26, %s24
  $region1: #{gpt2_forward.1} parent=0
    #allocation3 [shape = 'u8[8192]{0}', space=vmem, size = 0x2000, scoped, tag = 'output window, operand 0, single buffered']
    #allocation4 [shape = 's32[2]{0}', space=sflag, size = 0x8, scoped, tag = 'scoped memory for gpt2_forward.1']
    %28 = vsyncpa [#allocation4], 0
    loop: start=0, step=1, limit=4
    $region2: #{gpt2_forward.1} parent=1 // loop_pre_header
      _
    $region3: #{gpt2_forward.1} parent=1 // loop_header
      %s30 = sphi 0, %s34
      %p31 = scmp.ge.s32.totalorder %s30, 4
      %s38 = sphi 0, %s38
      %s40 = sphi 0, %s38
      %s41 = sphi 0, %s40
      %s55 = sphi 0, %s41
      %s61 = sphi 0, %s63
      %s64 = sphi 0, %s61
      %s65 = sphi 0, %s64
      %s81 = sphi 0, %s65
      %s87 = sphi 0, %s89
      %s90 = sphi 0, %s87
      %s91 = sphi 0, %s90
      %s107 = sphi 0, %s91
      %s113 = sphi 0, %s115
      %s116 = sphi 0, %s113
      %s117 = sphi 0, %s116
      %s133 = sphi 0, %s117
      %s139 = sphi 0, %s141
      %s142 = sphi 0, %s139
      %s143 = sphi 0, %s142
      %s159 = sphi 0, %s143
      %s165 = sphi 0, %s167
      %s168 = sphi 0, %s165
      %s169 = sphi 0, %s168
      %s185 = sphi 0, %s169
      %s191 = sphi 0, %s193
      %s194 = sphi 0, %s191
      %s195 = sphi 0, %s194
      %s211 = sphi 0, %s195
      %s217 = sphi 0, %s219
      %s220 = sphi 0, %s217
      %s221 = sphi 0, %s220
      %s237 = sphi 0, %s221
      %s243 = sphi 0, %s245
      %s246 = sphi 0, %s243
      %s247 = sphi 0, %s246
      %s263 = sphi 0, %s247
      %s269 = sphi 0, %s271
      %s272 = sphi 0, %s269
      %s273 = sphi 0, %s272
      %s289 = sphi 0, %s273
      %s295 = sphi 0, %s297
      %s298 = sphi 0, %s295
      %s299 = sphi 0, %s298
      %s315 = sphi 0, %s299
      %s321 = sphi 0, %s323
      %s324 = sphi 0, %s321
      %s325 = sphi 0, %s324
      %s341 = sphi 0, %s325
      %s347 = sphi 0, %s349
      %s350 = sphi 0, %s347
      %s351 = sphi 0, %s350
      %s367 = sphi 0, %s351
      %s373 = sphi 0, %s375
      %s376 = sphi 0, %s373
      %s377 = sphi 0, %s376
      %s393 = sphi 0, %s377
      %s399 = sphi 0, %s401
      %s402 = sphi 0, %s399
      %s403 = sphi 0, %s402
      %s419 = sphi 0, %s403
      %s425 = sphi 0, %s427
      %s428 = sphi 0, %s425
      %s429 = sphi 0, %s428
      %s445 = sphi 0, %s429
      %s451 = sphi 0, %s453
      %s454 = sphi 0, %s451
      %s455 = sphi 0, %s454
      %s471 = sphi 0, %s455
      %s475 = sphi 0, %s475
      %s477 = sphi 0, %s475
      %s478 = sphi 0, %s477
      %s492 = sphi 0, %s478
      %s496 = sphi 0, %s496
      %s498 = sphi 0, %s496
      %s499 = sphi 0, %s498
      %s513 = sphi 0, %s499
      %s517 = sphi 0, %s517
      %s519 = sphi 0, %s517
      %s520 = sphi 0, %s519
      %s534 = sphi 0, %s520
      %s538 = sphi 0, %s538
      %s540 = sphi 0, %s538
      %s541 = sphi 0, %s540
      %s555 = sphi 0, %s541
      %s561 = sphi 0, %s563
      %s564 = sphi 0, %s561
      %s565 = sphi 0, %s564
      %s581 = sphi 0, %s565
      %s587 = sphi 0, %s589
      %s590 = sphi 0, %s587
      %s591 = sphi 0, %s590
      %s607 = sphi 0, %s591
    $region4: #{gpt2_forward.1} parent=1 // loop_header_branch
      %33 = sbr.rel (%p31) target = $region8
    $region5: #{gpt2_forward.1} parent=1 // loop_body
      %s35 = ssub.s32 %s30, 1
      %s36 = ssub.s32 %s30, 2
      %s37 = sadd.s32 %s30, 1
      %s39 = sadd.s32 %s38, 1
      %p42 = scmp.eq.s32.totalorder %s30, 1
      %p43 = scmp.ne.s32.totalorder %s38, %s40
      %p44 = scmp.eq.s32.totalorder %s30, 0
      %p45 = por %p43, %p44
      %p46 = scmp.ne.s32.totalorder %s38, %s40
      %p47 = scmp.eq.s32.totalorder %s35, 1
      %p48 = por %p46, %p47
      %p49 = scmp.ne.s32.totalorder %s40, %s41
      %p50 = scmp.eq.s32.totalorder %s35, 0
      %p51 = por %p49, %p50
      %p52 = scmp.ne.s32.totalorder %s40, %s41
      %p53 = scmp.eq.s32.totalorder %s36, 1
      %p54 = por %p52, %p53
      %p56 = scmp.ne.s32.totalorder %s41, %s55
      %p57 = scmp.eq.s32.totalorder %s36, 0
      %p58 = por %p56, %p57
      %s59 = ssub.s32 %s30, %s37
      %p60 = scmp.eq.s32.totalorder %s59, 0
      %s62 = sadd.s32 %s61, 1
      %s63 = scalar_select %p60, %s61, %s62
      %p66 = pneg %p60
      %p67 = scmp.eq.s32.totalorder %s30, 1
      %p68 = por %p66, %p67
      %p69 = scmp.ne.s32.totalorder %s61, %s64
      %p70 = scmp.eq.s32.totalorder %s30, 0
      %p71 = por %p69, %p70
      %p72 = scmp.ne.s32.totalorder %s61, %s64
      %p73 = scmp.eq.s32.totalorder %s35, 1
      %p74 = por %p72, %p73
      %p75 = scmp.ne.s32.totalorder %s64, %s65
      %p76 = scmp.eq.s32.totalorder %s35, 0
      %p77 = por %p75, %p76
      %p78 = scmp.ne.s32.totalorder %s64, %s65
      %p79 = scmp.eq.s32.totalorder %s36, 1
      %p80 = por %p78, %p79
      %p82 = scmp.ne.s32.totalorder %s65, %s81
      %p83 = scmp.eq.s32.totalorder %s36, 0
      %p84 = por %p82, %p83
      %s85 = ssub.s32 %s30, %s37
      %p86 = scmp.eq.s32.totalorder %s85, 0
      %s88 = sadd.s32 %s87, 1
      %s89 = scalar_select %p86, %s87, %s88
      %p92 = pneg %p86
      %p93 = scmp.eq.s32.totalorder %s30, 1
      %p94 = por %p92, %p93
      %p95 = scmp.ne.s32.totalorder %s87, %s90
      %p96 = scmp.eq.s32.totalorder %s30, 0
      %p97 = por %p95, %p96
      %p98 = scmp.ne.s32.totalorder %s87, %s90
      %p99 = scmp.eq.s32.totalorder %s35, 1
      %p100 = por %p98, %p99
      %p101 = scmp.ne.s32.totalorder %s90, %s91
      %p102 = scmp.eq.s32.totalorder %s35, 0
      %p103 = por %p101, %p102
      %p104 = scmp.ne.s32.totalorder %s90, %s91
      %p105 = scmp.eq.s32.totalorder %s36, 1
      %p106 = por %p104, %p105
      %p108 = scmp.ne.s32.totalorder %s91, %s107
      %p109 = scmp.eq.s32.totalorder %s36, 0
      %p110 = por %p108, %p109
      %s111 = ssub.s32 %s30, %s37
      %p112 = scmp.eq.s32.totalorder %s111, 0
      %s114 = sadd.s32 %s113, 1
      %s115 = scalar_select %p112, %s113, %s114
      %p118 = pneg %p112
      %p119 = scmp.eq.s32.totalorder %s30, 1
      %p120 = por %p118, %p119
      %p121 = scmp.ne.s32.totalorder %s113, %s116
      %p122 = scmp.eq.s32.totalorder %s30, 0
      %p123 = por %p121, %p122
      %p124 = scmp.ne.s32.totalorder %s113, %s116
      %p125 = scmp.eq.s32.totalorder %s35, 1
      %p126 = por %p124, %p125
      %p127 = scmp.ne.s32.totalorder %s116, %s117
      %p128 = scmp.eq.s32.totalorder %s35, 0
      %p129 = por %p127, %p128
      %p130 = scmp.ne.s32.totalorder %s116, %s117
      %p131 = scmp.eq.s32.totalorder %s36, 1
      %p132 = por %p130, %p131
      %p134 = scmp.ne.s32.totalorder %s117, %s133
      %p135 = scmp.eq.s32.totalorder %s36, 0
      %p136 = por %p134, %p135
      %s137 = ssub.s32 %s30, %s37
      %p138 = scmp.eq.s32.totalorder %s137, 0
      %s140 = sadd.s32 %s139, 1
      %s141 = scalar_select %p138, %s139, %s140
      %p144 = pneg %p138
      %p145 = scmp.eq.s32.totalorder %s30, 1
      %p146 = por %p144, %p145
      %p147 = scmp.ne.s32.totalorder %s139, %s142
      %p148 = scmp.eq.s32.totalorder %s30, 0
      %p149 = por %p147, %p148
      %p150 = scmp.ne.s32.totalorder %s139, %s142
      %p151 = scmp.eq.s32.totalorder %s35, 1
      %p152 = por %p150, %p151
      %p153 = scmp.ne.s32.totalorder %s142, %s143
      %p154 = scmp.eq.s32.totalorder %s35, 0
      %p155 = por %p153, %p154
      %p156 = scmp.ne.s32.totalorder %s142, %s143
      %p157 = scmp.eq.s32.totalorder %s36, 1
      %p158 = por %p156, %p157
      %p160 = scmp.ne.s32.totalorder %s143, %s159
      %p161 = scmp.eq.s32.totalorder %s36, 0
      %p162 = por %p160, %p161
      %s163 = ssub.s32 %s30, %s37
      %p164 = scmp.eq.s32.totalorder %s163, 0
      %s166 = sadd.s32 %s165, 1
      %s167 = scalar_select %p164, %s165, %s166
      %p170 = pneg %p164
      %p171 = scmp.eq.s32.totalorder %s30, 1
      %p172 = por %p170, %p171
      %p173 = scmp.ne.s32.totalorder %s165, %s168
      %p174 = scmp.eq.s32.totalorder %s30, 0
      %p175 = por %p173, %p174
      %p176 = scmp.ne.s32.totalorder %s165, %s168
      %p177 = scmp.eq.s32.totalorder %s35, 1
      %p178 = por %p176, %p177
      %p179 = scmp.ne.s32.totalorder %s168, %s169
      %p180 = scmp.eq.s32.totalorder %s35, 0
      %p181 = por %p179, %p180
      %p182 = scmp.ne.s32.totalorder %s168, %s169
      %p183 = scmp.eq.s32.totalorder %s36, 1
      %p184 = por %p182, %p183
      %p186 = scmp.ne.s32.totalorder %s169, %s185
      %p187 = scmp.eq.s32.totalorder %s36, 0
      %p188 = por %p186, %p187
      %s189 = ssub.s32 %s30, %s37
      %p190 = scmp.eq.s32.totalorder %s189, 0
      %s192 = sadd.s32 %s191, 1
      %s193 = scalar_select %p190, %s191, %s192
      %p196 = pneg %p190
      %p197 = scmp.eq.s32.totalorder %s30, 1
      %p198 = por %p196, %p197
      %p199 = scmp.ne.s32.totalorder %s191, %s194
      %p200 = scmp.eq.s32.totalorder %s30, 0
      %p201 = por %p199, %p200
      %p202 = scmp.ne.s32.totalorder %s191, %s194
      %p203 = scmp.eq.s32.totalorder %s35, 1
      %p204 = por %p202, %p203
      %p205 = scmp.ne.s32.totalorder %s194, %s195
      %p206 = scmp.eq.s32.totalorder %s35, 0
      %p207 = por %p205, %p206
      %p208 = scmp.ne.s32.totalorder %s194, %s195
      %p209 = scmp.eq.s32.totalorder %s36, 1
      %p210 = por %p208, %p209
      %p212 = scmp.ne.s32.totalorder %s195, %s211
      %p213 = scmp.eq.s32.totalorder %s36, 0
      %p214 = por %p212, %p213
      %s215 = ssub.s32 %s30, %s37
      %p216 = scmp.eq.s32.totalorder %s215, 0
      %s218 = sadd.s32 %s217, 1
      %s219 = scalar_select %p216, %s217, %s218
      %p222 = pneg %p216
      %p223 = scmp.eq.s32.totalorder %s30, 1
      %p224 = por %p222, %p223
      %p225 = scmp.ne.s32.totalorder %s217, %s220
      %p226 = scmp.eq.s32.totalorder %s30, 0
      %p227 = por %p225, %p226
      %p228 = scmp.ne.s32.totalorder %s217, %s220
      %p229 = scmp.eq.s32.totalorder %s35, 1
      %p230 = por %p228, %p229
      %p231 = scmp.ne.s32.totalorder %s220, %s221
      %p232 = scmp.eq.s32.totalorder %s35, 0
      %p233 = por %p231, %p232
      %p234 = scmp.ne.s32.totalorder %s220, %s221
      %p235 = scmp.eq.s32.totalorder %s36, 1
      %p236 = por %p234, %p235
      %p238 = scmp.ne.s32.totalorder %s221, %s237
      %p239 = scmp.eq.s32.totalorder %s36, 0
      %p240 = por %p238, %p239
      %s241 = ssub.s32 %s30, %s37
      %p242 = scmp.eq.s32.totalorder %s241, 0
      %s244 = sadd.s32 %s243, 1
      %s245 = scalar_select %p242, %s243, %s244
      %p248 = pneg %p242
      %p249 = scmp.eq.s32.totalorder %s30, 1
      %p250 = por %p248, %p249
      %p251 = scmp.ne.s32.totalorder %s243, %s246
      %p252 = scmp.eq.s32.totalorder %s30, 0
      %p253 = por %p251, %p252
      %p254 = scmp.ne.s32.totalorder %s243, %s246
      %p255 = scmp.eq.s32.totalorder %s35, 1
      %p256 = por %p254, %p255
      %p257 = scmp.ne.s32.totalorder %s246, %s247
      %p258 = scmp.eq.s32.totalorder %s35, 0
      %p259 = por %p257, %p258
      %p260 = scmp.ne.s32.totalorder %s246, %s247
      %p261 = scmp.eq.s32.totalorder %s36, 1
      %p262 = por %p260, %p261
      %p264 = scmp.ne.s32.totalorder %s247, %s263
      %p265 = scmp.eq.s32.totalorder %s36, 0
      %p266 = por %p264, %p265
      %s267 = ssub.s32 %s30, %s37
      %p268 = scmp.eq.s32.totalorder %s267, 0
      %s270 = sadd.s32 %s269, 1
      %s271 = scalar_select %p268, %s269, %s270
      %p274 = pneg %p268
      %p275 = scmp.eq.s32.totalorder %s30, 1
      %p276 = por %p274, %p275
      %p277 = scmp.ne.s32.totalorder %s269, %s272
      %p278 = scmp.eq.s32.totalorder %s30, 0
      %p279 = por %p277, %p278
      %p280 = scmp.ne.s32.totalorder %s269, %s272
      %p281 = scmp.eq.s32.totalorder %s35, 1
      %p282 = por %p280, %p281
      %p283 = scmp.ne.s32.totalorder %s272, %s273
      %p284 = scmp.eq.s32.totalorder %s35, 0
      %p285 = por %p283, %p284
      %p286 = scmp.ne.s32.totalorder %s272, %s273
      %p287 = scmp.eq.s32.totalorder %s36, 1
      %p288 = por %p286, %p287
      %p290 = scmp.ne.s32.totalorder %s273, %s289
      %p291 = scmp.eq.s32.totalorder %s36, 0
      %p292 = por %p290, %p291
      %s293 = ssub.s32 %s30, %s37
      %p294 = scmp.eq.s32.totalorder %s293, 0
      %s296 = sadd.s32 %s295, 1
      %s297 = scalar_select %p294, %s295, %s296
      %p300 = pneg %p294
      %p301 = scmp.eq.s32.totalorder %s30, 1
      %p302 = por %p300, %p301
      %p303 = scmp.ne.s32.totalorder %s295, %s298
      %p304 = scmp.eq.s32.totalorder %s30, 0
      %p305 = por %p303, %p304
      %p306 = scmp.ne.s32.totalorder %s295, %s298
      %p307 = scmp.eq.s32.totalorder %s35, 1
      %p308 = por %p306, %p307
      %p309 = scmp.ne.s32.totalorder %s298, %s299
      %p310 = scmp.eq.s32.totalorder %s35, 0
      %p311 = por %p309, %p310
      %p312 = scmp.ne.s32.totalorder %s298, %s299
      %p313 = scmp.eq.s32.totalorder %s36, 1
      %p314 = por %p312, %p313
      %p316 = scmp.ne.s32.totalorder %s299, %s315
      %p317 = scmp.eq.s32.totalorder %s36, 0
      %p318 = por %p316, %p317
      %s319 = ssub.s32 %s30, %s37
      %p320 = scmp.eq.s32.totalorder %s319, 0
      %s322 = sadd.s32 %s321, 1
      %s323 = scalar_select %p320, %s321, %s322
      %p326 = pneg %p320
      %p327 = scmp.eq.s32.totalorder %s30, 1
      %p328 = por %p326, %p327
      %p329 = scmp.ne.s32.totalorder %s321, %s324
      %p330 = scmp.eq.s32.totalorder %s30, 0
      %p331 = por %p329, %p330
      %p332 = scmp.ne.s32.totalorder %s321, %s324
      %p333 = scmp.eq.s32.totalorder %s35, 1
      %p334 = por %p332, %p333
      %p335 = scmp.ne.s32.totalorder %s324, %s325
      %p336 = scmp.eq.s32.totalorder %s35, 0
      %p337 = por %p335, %p336
      %p338 = scmp.ne.s32.totalorder %s324, %s325
      %p339 = scmp.eq.s32.totalorder %s36, 1
      %p340 = por %p338, %p339
      %p342 = scmp.ne.s32.totalorder %s325, %s341
      %p343 = scmp.eq.s32.totalorder %s36, 0
      %p344 = por %p342, %p343
      %s345 = ssub.s32 %s30, %s37
      %p346 = scmp.eq.s32.totalorder %s345, 0
      %s348 = sadd.s32 %s347, 1
      %s349 = scalar_select %p346, %s347, %s348
      %p352 = pneg %p346
      %p353 = scmp.eq.s32.totalorder %s30, 1
      %p354 = por %p352, %p353
      %p355 = scmp.ne.s32.totalorder %s347, %s350
      %p356 = scmp.eq.s32.totalorder %s30, 0
      %p357 = por %p355, %p356
      %p358 = scmp.ne.s32.totalorder %s347, %s350
      %p359 = scmp.eq.s32.totalorder %s35, 1
      %p360 = por %p358, %p359
      %p361 = scmp.ne.s32.totalorder %s350, %s351
      %p362 = scmp.eq.s32.totalorder %s35, 0
      %p363 = por %p361, %p362
      %p364 = scmp.ne.s32.totalorder %s350, %s351
      %p365 = scmp.eq.s32.totalorder %s36, 1
      %p366 = por %p364, %p365
      %p368 = scmp.ne.s32.totalorder %s351, %s367
      %p369 = scmp.eq.s32.totalorder %s36, 0
      %p370 = por %p368, %p369
      %s371 = ssub.s32 %s30, %s37
      %p372 = scmp.eq.s32.totalorder %s371, 0
      %s374 = sadd.s32 %s373, 1
      %s375 = scalar_select %p372, %s373, %s374
      %p378 = pneg %p372
      %p379 = scmp.eq.s32.totalorder %s30, 1
      %p380 = por %p378, %p379
      %p381 = scmp.ne.s32.totalorder %s373, %s376
      %p382 = scmp.eq.s32.totalorder %s30, 0
      %p383 = por %p381, %p382
      %p384 = scmp.ne.s32.totalorder %s373, %s376
      %p385 = scmp.eq.s32.totalorder %s35, 1
      %p386 = por %p384, %p385
      %p387 = scmp.ne.s32.totalorder %s376, %s377
      %p388 = scmp.eq.s32.totalorder %s35, 0
      %p389 = por %p387, %p388
      %p390 = scmp.ne.s32.totalorder %s376, %s377
      %p391 = scmp.eq.s32.totalorder %s36, 1
      %p392 = por %p390, %p391
      %p394 = scmp.ne.s32.totalorder %s377, %s393
      %p395 = scmp.eq.s32.totalorder %s36, 0
      %p396 = por %p394, %p395
      %s397 = ssub.s32 %s30, %s37
      %p398 = scmp.eq.s32.totalorder %s397, 0
      %s400 = sadd.s32 %s399, 1
      %s401 = scalar_select %p398, %s399, %s400
      %p404 = pneg %p398
      %p405 = scmp.eq.s32.totalorder %s30, 1
      %p406 = por %p404, %p405
      %p407 = scmp.ne.s32.totalorder %s399, %s402
      %p408 = scmp.eq.s32.totalorder %s30, 0
      %p409 = por %p407, %p408
      %p410 = scmp.ne.s32.totalorder %s399, %s402
      %p411 = scmp.eq.s32.totalorder %s35, 1
      %p412 = por %p410, %p411
      %p413 = scmp.ne.s32.totalorder %s402, %s403
      %p414 = scmp.eq.s32.totalorder %s35, 0
      %p415 = por %p413, %p414
      %p416 = scmp.ne.s32.totalorder %s402, %s403
      %p417 = scmp.eq.s32.totalorder %s36, 1
      %p418 = por %p416, %p417
      %p420 = scmp.ne.s32.totalorder %s403, %s419
      %p421 = scmp.eq.s32.totalorder %s36, 0
      %p422 = por %p420, %p421
      %s423 = ssub.s32 %s30, %s37
      %p424 = scmp.eq.s32.totalorder %s423, 0
      %s426 = sadd.s32 %s425, 1
      %s427 = scalar_select %p424, %s425, %s426
      %p430 = pneg %p424
      %p431 = scmp.eq.s32.totalorder %s30, 1
      %p432 = por %p430, %p431
      %p433 = scmp.ne.s32.totalorder %s425, %s428
      %p434 = scmp.eq.s32.totalorder %s30, 0
      %p435 = por %p433, %p434
      %p436 = scmp.ne.s32.totalorder %s425, %s428
      %p437 = scmp.eq.s32.totalorder %s35, 1
      %p438 = por %p436, %p437
      %p439 = scmp.ne.s32.totalorder %s428, %s429
      %p440 = scmp.eq.s32.totalorder %s35, 0
      %p441 = por %p439, %p440
      %p442 = scmp.ne.s32.totalorder %s428, %s429
      %p443 = scmp.eq.s32.totalorder %s36, 1
      %p444 = por %p442, %p443
      %p446 = scmp.ne.s32.totalorder %s429, %s445
      %p447 = scmp.eq.s32.totalorder %s36, 0
      %p448 = por %p446, %p447
      %s449 = ssub.s32 %s30, %s37
      %p450 = scmp.eq.s32.totalorder %s449, 0
      %s452 = sadd.s32 %s451, 1
      %s453 = scalar_select %p450, %s451, %s452
      %p456 = pneg %p450
      %p457 = scmp.eq.s32.totalorder %s30, 1
      %p458 = por %p456, %p457
      %p459 = scmp.ne.s32.totalorder %s451, %s454
      %p460 = scmp.eq.s32.totalorder %s30, 0
      %p461 = por %p459, %p460
      %p462 = scmp.ne.s32.totalorder %s451, %s454
      %p463 = scmp.eq.s32.totalorder %s35, 1
      %p464 = por %p462, %p463
      %p465 = scmp.ne.s32.totalorder %s454, %s455
      %p466 = scmp.eq.s32.totalorder %s35, 0
      %p467 = por %p465, %p466
      %p468 = scmp.ne.s32.totalorder %s454, %s455
      %p469 = scmp.eq.s32.totalorder %s36, 1
      %p470 = por %p468, %p469
      %p472 = scmp.ne.s32.totalorder %s455, %s471
      %p473 = scmp.eq.s32.totalorder %s36, 0
      %p474 = por %p472, %p473
      %s476 = sadd.s32 %s475, 1
      %p479 = scmp.eq.s32.totalorder %s30, 1
      %p480 = scmp.ne.s32.totalorder %s475, %s477
      %p481 = scmp.eq.s32.totalorder %s30, 0
      %p482 = por %p480, %p481
      %p483 = scmp.ne.s32.totalorder %s475, %s477
      %p484 = scmp.eq.s32.totalorder %s35, 1
      %p485 = por %p483, %p484
      %p486 = scmp.ne.s32.totalorder %s477, %s478
      %p487 = scmp.eq.s32.totalorder %s35, 0
      %p488 = por %p486, %p487
      %p489 = scmp.ne.s32.totalorder %s477, %s478
      %p490 = scmp.eq.s32.totalorder %s36, 1
      %p491 = por %p489, %p490
      %p493 = scmp.ne.s32.totalorder %s478, %s492
      %p494 = scmp.eq.s32.totalorder %s36, 0
      %p495 = por %p493, %p494
      %s497 = sadd.s32 %s496, 1
      %p500 = scmp.eq.s32.totalorder %s30, 1
      %p501 = scmp.ne.s32.totalorder %s496, %s498
      %p502 = scmp.eq.s32.totalorder %s30, 0
      %p503 = por %p501, %p502
      %p504 = scmp.ne.s32.totalorder %s496, %s498
      %p505 = scmp.eq.s32.totalorder %s35, 1
      %p506 = por %p504, %p505
      %p507 = scmp.ne.s32.totalorder %s498, %s499
      %p508 = scmp.eq.s32.totalorder %s35, 0
      %p509 = por %p507, %p508
      %p510 = scmp.ne.s32.totalorder %s498, %s499
      %p511 = scmp.eq.s32.totalorder %s36, 1
      %p512 = por %p510, %p511
      %p514 = scmp.ne.s32.totalorder %s499, %s513
      %p515 = scmp.eq.s32.totalorder %s36, 0
      %p516 = por %p514, %p515
      %s518 = sadd.s32 %s517, 1
      %p521 = scmp.eq.s32.totalorder %s30, 1
      %p522 = scmp.ne.s32.totalorder %s517, %s519
      %p523 = scmp.eq.s32.totalorder %s30, 0
      %p524 = por %p522, %p523
      %p525 = scmp.ne.s32.totalorder %s517, %s519
      %p526 = scmp.eq.s32.totalorder %s35, 1
      %p527 = por %p525, %p526
      %p528 = scmp.ne.s32.totalorder %s519, %s520
      %p529 = scmp.eq.s32.totalorder %s35, 0
      %p530 = por %p528, %p529
      %p531 = scmp.ne.s32.totalorder %s519, %s520
      %p532 = scmp.eq.s32.totalorder %s36, 1
      %p533 = por %p531, %p532
      %p535 = scmp.ne.s32.totalorder %s520, %s534
      %p536 = scmp.eq.s32.totalorder %s36, 0
      %p537 = por %p535, %p536
      %s539 = sadd.s32 %s538, 1
      %p542 = scmp.eq.s32.totalorder %s30, 1
      %p543 = scmp.ne.s32.totalorder %s538, %s540
      %p544 = scmp.eq.s32.totalorder %s30, 0
      %p545 = por %p543, %p544
      %p546 = scmp.ne.s32.totalorder %s538, %s540
      %p547 = scmp.eq.s32.totalorder %s35, 1
      %p548 = por %p546, %p547
      %p549 = scmp.ne.s32.totalorder %s540, %s541
      %p550 = scmp.eq.s32.totalorder %s35, 0
      %p551 = por %p549, %p550
      %p552 = scmp.ne.s32.totalorder %s540, %s541
      %p553 = scmp.eq.s32.totalorder %s36, 1
      %p554 = por %p552, %p553
      %p556 = scmp.ne.s32.totalorder %s541, %s555
      %p557 = scmp.eq.s32.totalorder %s36, 0
      %p558 = por %p556, %p557
      %s559 = ssub.s32 %s30, %s37
      %p560 = scmp.eq.s32.totalorder %s559, 0
      %s562 = sadd.s32 %s561, 1
      %s563 = scalar_select %p560, %s561, %s562
      %p566 = pneg %p560
      %p567 = scmp.eq.s32.totalorder %s30, 1
      %p568 = por %p566, %p567
      %p569 = scmp.ne.s32.totalorder %s561, %s564
      %p570 = scmp.eq.s32.totalorder %s30, 0
      %p571 = por %p569, %p570
      %p572 = scmp.ne.s32.totalorder %s561, %s564
      %p573 = scmp.eq.s32.totalorder %s35, 1
      %p574 = por %p572, %p573
      %p575 = scmp.ne.s32.totalorder %s564, %s565
      %p576 = scmp.eq.s32.totalorder %s35, 0
      %p577 = por %p575, %p576
      %p578 = scmp.ne.s32.totalorder %s564, %s565
      %p579 = scmp.eq.s32.totalorder %s36, 1
      %p580 = por %p578, %p579
      %p582 = scmp.ne.s32.totalorder %s565, %s581
      %p583 = scmp.eq.s32.totalorder %s36, 0
      %p584 = por %p582, %p583
      %s585 = ssub.s32 %s30, %s37
      %p586 = scmp.eq.s32.totalorder %s585, 0
      %s588 = sadd.s32 %s587, 1
      %s589 = scalar_select %p586, %s587, %s588
      %p592 = pneg %p586
      %p593 = scmp.eq.s32.totalorder %s30, 1
      %p594 = por %p592, %p593
      %p595 = scmp.ne.s32.totalorder %s587, %s590
      %p596 = scmp.eq.s32.totalorder %s30, 0
      %p597 = por %p595, %p596
      %p598 = scmp.ne.s32.totalorder %s587, %s590
      %p599 = scmp.eq.s32.totalorder %s35, 1
      %p600 = por %p598, %p599
      %p601 = scmp.ne.s32.totalorder %s590, %s591
      %p602 = scmp.eq.s32.totalorder %s35, 0
      %p603 = por %p601, %p602
      %p604 = scmp.ne.s32.totalorder %s590, %s591
      %p605 = scmp.eq.s32.totalorder %s36, 1
      %p606 = por %p604, %p605
      %p608 = scmp.ne.s32.totalorder %s591, %s607
      %p609 = scmp.eq.s32.totalorder %s36, 0
      %p610 = por %p608, %p609
      %p611 = scmp.le.s32.totalorder 1, %s30
      %p612 = scmp.lt.s32.totalorder %s30, 3
      %p613 = pnand %p611, %p612
      %p614 = pneg %p613
      // Predicated region
      $region9: #{gpt2_forward.1} parent=5 // pred_check
        _
      $region10: #{gpt2_forward.1} parent=5 // pred_check_branch
        %616 = sbr.rel (%p613) target = $region12
      $region11: #{gpt2_forward.1} parent=5 // pred_region
        %s617 = ssub.s32 %s30, 1
        // Predicated region
        $region13: #{gpt2_forward.1} parent=11 // pred_check
          %p618 = pneg %p51
        $region14: #{gpt2_forward.1} parent=11 // pred_check_branch
          %620 = sbr.rel (%p618) target = $region16
        $region15: #{gpt2_forward.1} parent=11 // pred_region
          _
        $region16: #{gpt2_forward.1} parent=11 // pred_fallthru
          _
        // Predicated region
        $region17: #{gpt2_forward.1} parent=11 // pred_check
          %p621 = pneg %p488
        $region18: #{gpt2_forward.1} parent=11 // pred_check_branch
          %623 = sbr.rel (%p621) target = $region20
        $region19: #{gpt2_forward.1} parent=11 // pred_region
          _
        $region20: #{gpt2_forward.1} parent=11 // pred_fallthru
          _
        // Predicated region
        $region21: #{gpt2_forward.1} parent=11 // pred_check
          %p624 = pneg %p509
        $region22: #{gpt2_forward.1} parent=11 // pred_check_branch
          %626 = sbr.rel (%p624) target = $region24
        $region23: #{gpt2_forward.1} parent=11 // pred_region
          _
        $region24: #{gpt2_forward.1} parent=11 // pred_fallthru
          _
        // Predicated region
        $region25: #{gpt2_forward.1} parent=11 // pred_check
          %p627 = pneg %p530
        $region26: #{gpt2_forward.1} parent=11 // pred_check_branch
          %629 = sbr.rel (%p627) target = $region28
        $region27: #{gpt2_forward.1} parent=11 // pred_region
          _
        $region28: #{gpt2_forward.1} parent=11 // pred_fallthru
          _
      $region12: #{gpt2_forward.1} parent=5 // pred_fallthru
        _
      %p630 = scmp.lt.s32.totalorder %s30, 2
      // Predicated region
      $region29: #{gpt2_forward.1} parent=5 // pred_check
        %p631 = pneg %p630
      $region30: #{gpt2_forward.1} parent=5 // pred_check_branch
        %633 = sbr.rel (%p631) target = $region32
      $region31: #{gpt2_forward.1} parent=5 // pred_region
        // Predicated region
        $region33: #{gpt2_forward.1} parent=31 // pred_check
          %p634 = pneg %p71
        $region34: #{gpt2_forward.1} parent=31 // pred_check_branch
          %636 = sbr.rel (%p634) target = $region36
        $region35: #{gpt2_forward.1} parent=31 // pred_region
          %p637 = scmp.lt.s32.totalorder %s30, 1
          %s638 = scalar_select %p637, %s30, 1
          %s639 = scalar_lea.vmem %s1, %s638
        $region36: #{gpt2_forward.1} parent=31 // pred_fallthru
          _
        // Predicated region
        $region37: #{gpt2_forward.1} parent=31 // pred_check
          %p640 = pneg %p97
        $region38: #{gpt2_forward.1} parent=31 // pred_check_branch
          %642 = sbr.rel (%p640) target = $region40
        $region39: #{gpt2_forward.1} parent=31 // pred_region
          %p643 = scmp.lt.s32.totalorder %s30, 1
          %s644 = scalar_select %p643, %s30, 1
          %s645 = scalar_lea.vmem %s2, %s644
        $region40: #{gpt2_forward.1} parent=31 // pred_fallthru
          _
        // Predicated region
        $region41: #{gpt2_forward.1} parent=31 // pred_check
          %p646 = pneg %p123
        $region42: #{gpt2_forward.1} parent=31 // pred_check_branch
          %648 = sbr.rel (%p646) target = $region44
        $region43: #{gpt2_forward.1} parent=31 // pred_region
          %p649 = scmp.lt.s32.totalorder %s30, 1
          %s650 = scalar_select %p649, %s30, 1
          %s651 = smul.addr %s650, 4
          %s652 = smul.addr %s651, 8
          %s653 = scalar_lea.vmem %s3, %s652
        $region44: #{gpt2_forward.1} parent=31 // pred_fallthru
          _
        // Predicated region
        $region45: #{gpt2_forward.1} parent=31 // pred_check
          %p654 = pneg %p149
        $region46: #{gpt2_forward.1} parent=31 // pred_check_branch
          %656 = sbr.rel (%p654) target = $region48
        $region47: #{gpt2_forward.1} parent=31 // pred_region
          %p657 = scmp.lt.s32.totalorder %s30, 1
          %s658 = scalar_select %p657, %s30, 1
          %s659 = scalar_lea.vmem %s4, %s658
        $region48: #{gpt2_forward.1} parent=31 // pred_fallthru
          _
        // Predicated region
        $region49: #{gpt2_forward.1} parent=31 // pred_check
          %p660 = pneg %p175
        $region50: #{gpt2_forward.1} parent=31 // pred_check_branch
          %662 = sbr.rel (%p660) target = $region52
        $region51: #{gpt2_forward.1} parent=31 // pred_region
          %p663 = scmp.lt.s32.totalorder %s30, 1
          %s664 = scalar_select %p663, %s30, 1
          %s665 = smul.addr %s664, 4
          %s666 = smul.addr %s665, 8
          %s667 = scalar_lea.vmem %s5, %s666
        $region52: #{gpt2_forward.1} parent=31 // pred_fallthru
          _
        // Predicated region
        $region53: #{gpt2_forward.1} parent=31 // pred_check
          %p668 = pneg %p201
        $region54: #{gpt2_forward.1} parent=31 // pred_check_branch
          %670 = sbr.rel (%p668) target = $region56
        $region55: #{gpt2_forward.1} parent=31 // pred_region
          %p671 = scmp.lt.s32.totalorder %s30, 1
          %s672 = scalar_select %p671, %s30, 1
          %s673 = scalar_lea.vmem %s6, %s672
        $region56: #{gpt2_forward.1} parent=31 // pred_fallthru
          _
        // Predicated region
        $region57: #{gpt2_forward.1} parent=31 // pred_check
          %p674 = pneg %p227
        $region58: #{gpt2_forward.1} parent=31 // pred_check_branch
          %676 = sbr.rel (%p674) target = $region60
        $region59: #{gpt2_forward.1} parent=31 // pred_region
          %p677 = scmp.lt.s32.totalorder %s30, 1
          %s678 = scalar_select %p677, %s30, 1
          %s679 = smul.addr %s678, 4
          %s680 = smul.addr %s679, 8
          %s681 = scalar_lea.vmem %s7, %s680
        $region60: #{gpt2_forward.1} parent=31 // pred_fallthru
          _
        // Predicated region
        $region61: #{gpt2_forward.1} parent=31 // pred_check
          %p682 = pneg %p253
        $region62: #{gpt2_forward.1} parent=31 // pred_check_branch
          %684 = sbr.rel (%p682) target = $region64
        $region63: #{gpt2_forward.1} parent=31 // pred_region
          %p685 = scmp.lt.s32.totalorder %s30, 1
          %s686 = scalar_select %p685, %s30, 1
          %s687 = scalar_lea.vmem %s8, %s686
        $region64: #{gpt2_forward.1} parent=31 // pred_fallthru
          _
        // Predicated region
        $region65: #{gpt2_forward.1} parent=31 // pred_check
          %p688 = pneg %p279
        $region66: #{gpt2_forward.1} parent=31 // pred_check_branch
          %690 = sbr.rel (%p688) target = $region68
        $region67: #{gpt2_forward.1} parent=31 // pred_region
          %p691 = scmp.lt.s32.totalorder %s30, 1
          %s692 = scalar_select %p691, %s30, 1
          %s693 = smul.addr %s692, 4
          %s694 = smul.addr %s693, 8
          %s695 = scalar_lea.vmem %s9, %s694
        $region68: #{gpt2_forward.1} parent=31 // pred_fallthru
          _
        // Predicated region
        $region69: #{gpt2_forward.1} parent=31 // pred_check
          %p696 = pneg %p305
        $region70: #{gpt2_forward.1} parent=31 // pred_check_branch
          %698 = sbr.rel (%p696) target = $region72
        $region71: #{gpt2_forward.1} parent=31 // pred_region
          %p699 = scmp.lt.s32.totalorder %s30, 1
          %s700 = scalar_select %p699, %s30, 1
          %s701 = scalar_lea.vmem %s10, %s700
        $region72: #{gpt2_forward.1} parent=31 // pred_fallthru
          _
        // Predicated region
        $region73: #{gpt2_forward.1} parent=31 // pred_check
          %p702 = pneg %p331
        $region74: #{gpt2_forward.1} parent=31 // pred_check_branch
          %704 = sbr.rel (%p702) target = $region76
        $region75: #{gpt2_forward.1} parent=31 // pred_region
          %p705 = scmp.lt.s32.totalorder %s30, 1
          %s706 = scalar_select %p705, %s30, 1
          %s707 = scalar_lea.vmem %s11, %s706
        $region76: #{gpt2_forward.1} parent=31 // pred_fallthru
          _
        // Predicated region
        $region77: #{gpt2_forward.1} parent=31 // pred_check
          %p708 = pneg %p357
        $region78: #{gpt2_forward.1} parent=31 // pred_check_branch
          %710 = sbr.rel (%p708) target = $region80
        $region79: #{gpt2_forward.1} parent=31 // pred_region
          %p711 = scmp.lt.s32.totalorder %s30, 1
          %s712 = scalar_select %p711, %s30, 1
          %s713 = scalar_lea.vmem %s12, %s712
        $region80: #{gpt2_forward.1} parent=31 // pred_fallthru
          _
        // Predicated region
        $region81: #{gpt2_forward.1} parent=31 // pred_check
          %p714 = pneg %p383
        $region82: #{gpt2_forward.1} parent=31 // pred_check_branch
          %716 = sbr.rel (%p714) target = $region84
        $region83: #{gpt2_forward.1} parent=31 // pred_region
          %p717 = scmp.lt.s32.totalorder %s30, 1
          %s718 = scalar_select %p717, %s30, 1
          %s719 = smul.addr %s718, 4
          %s720 = smul.addr %s719, 8
          %s721 = scalar_lea.vmem %s13, %s720
        $region84: #{gpt2_forward.1} parent=31 // pred_fallthru
          _
        // Predicated region
        $region85: #{gpt2_forward.1} parent=31 // pred_check
          %p722 = pneg %p409
        $region86: #{gpt2_forward.1} parent=31 // pred_check_branch
          %724 = sbr.rel (%p722) target = $region88
        $region87: #{gpt2_forward.1} parent=31 // pred_region
          %p725 = scmp.lt.s32.totalorder %s30, 1
          %s726 = scalar_select %p725, %s30, 1
          %s727 = scalar_lea.vmem %s14, %s726
        $region88: #{gpt2_forward.1} parent=31 // pred_fallthru
          _
        // Predicated region
        $region89: #{gpt2_forward.1} parent=31 // pred_check
          %p728 = pneg %p435
        $region90: #{gpt2_forward.1} parent=31 // pred_check_branch
          %730 = sbr.rel (%p728) target = $region92
        $region91: #{gpt2_forward.1} parent=31 // pred_region
          %p731 = scmp.lt.s32.totalorder %s30, 1
          %s732 = scalar_select %p731, %s30, 1
          %s733 = smul.addr %s732, 16
          %s734 = smul.addr %s733, 8
          %s735 = scalar_lea.vmem %s15, %s734
        $region92: #{gpt2_forward.1} parent=31 // pred_fallthru
          _
        // Predicated region
        $region93: #{gpt2_forward.1} parent=31 // pred_check
          %p736 = pneg %p461
        $region94: #{gpt2_forward.1} parent=31 // pred_check_branch
          %738 = sbr.rel (%p736) target = $region96
        $region95: #{gpt2_forward.1} parent=31 // pred_region
          %p739 = scmp.lt.s32.totalorder %s30, 1
          %s740 = scalar_select %p739, %s30, 1
          %s741 = scalar_lea.vmem %s16, %s740
        $region96: #{gpt2_forward.1} parent=31 // pred_fallthru
          _
      $region32: #{gpt2_forward.1} parent=5 // pred_fallthru
        _
      %p742 = scmp.le.s32.totalorder 1, %s30
      %p743 = scmp.lt.s32.totalorder %s30, 3
      %p744 = pnand %p742, %p743
      %p745 = pneg %p744
      // Predicated region
      $region97: #{gpt2_forward.1} parent=5 // pred_check
        _
      $region98: #{gpt2_forward.1} parent=5 // pred_check_branch
        %747 = sbr.rel (%p744) target = $region100
      $region99: #{gpt2_forward.1} parent=5 // pred_region
        %s748 = ssub.s32 %s30, 1
        %p749 = pneg %p51
        %p750 = pneg %p48
        %p751 = scmp.lt.s32.totalorder %s35, 1
        %s752 = scalar_select %p751, %s35, 1
        %s753 = scalar_lea.vmem %s1, %s752
        %p754 = pneg %p77
        %p755 = pneg %p74
        %p756 = scmp.lt.s32.totalorder %s35, 1
        %s757 = scalar_select %p756, %s35, 1
        %s758 = scalar_lea.vmem %s2, %s757
        %p759 = pneg %p103
        %p760 = pneg %p100
        %p761 = scmp.lt.s32.totalorder %s35, 1
        %s762 = scalar_select %p761, %s35, 1
        %s763 = smul.addr %s762, 4
        %s764 = smul.addr %s763, 8
        %s765 = scalar_lea.vmem %s3, %s764
        %p766 = pneg %p129
        %p767 = pneg %p126
        %p768 = scmp.lt.s32.totalorder %s35, 1
        %s769 = scalar_select %p768, %s35, 1
        %s770 = scalar_lea.vmem %s4, %s769
        %p771 = pneg %p155
        %p772 = pneg %p152
        %p773 = scmp.lt.s32.totalorder %s35, 1
        %s774 = scalar_select %p773, %s35, 1
        %s775 = smul.addr %s774, 4
        %s776 = smul.addr %s775, 8
        %s777 = scalar_lea.vmem %s5, %s776
        %p778 = pneg %p181
        %p779 = pneg %p178
        %p780 = scmp.lt.s32.totalorder %s35, 1
        %s781 = scalar_select %p780, %s35, 1
        %s782 = scalar_lea.vmem %s6, %s781
        %p783 = pneg %p207
        %p784 = pneg %p204
        %p785 = scmp.lt.s32.totalorder %s35, 1
        %s786 = scalar_select %p785, %s35, 1
        %s787 = smul.addr %s786, 4
        %s788 = smul.addr %s787, 8
        %s789 = scalar_lea.vmem %s7, %s788
        %p790 = pneg %p233
        %p791 = pneg %p230
        %p792 = scmp.lt.s32.totalorder %s35, 1
        %s793 = scalar_select %p792, %s35, 1
        %s794 = scalar_lea.vmem %s8, %s793
        %p795 = pneg %p259
        %p796 = pneg %p256
        %p797 = scmp.lt.s32.totalorder %s35, 1
        %s798 = scalar_select %p797, %s35, 1
        %s799 = smul.addr %s798, 4
        %s800 = smul.addr %s799, 8
        %s801 = scalar_lea.vmem %s9, %s800
        %p802 = pneg %p285
        %p803 = pneg %p282
        %p804 = scmp.lt.s32.totalorder %s35, 1
        %s805 = scalar_select %p804, %s35, 1
        %s806 = scalar_lea.vmem %s10, %s805
        %p807 = pneg %p311
        %p808 = pneg %p308
        %p809 = scmp.lt.s32.totalorder %s35, 1
        %s810 = scalar_select %p809, %s35, 1
        %s811 = scalar_lea.vmem %s11, %s810
        %p812 = pneg %p337
        %p813 = pneg %p334
        %p814 = scmp.lt.s32.totalorder %s35, 1
        %s815 = scalar_select %p814, %s35, 1
        %s816 = scalar_lea.vmem %s12, %s815
        %p817 = pneg %p363
        %p818 = pneg %p360
        %p819 = scmp.lt.s32.totalorder %s35, 1
        %s820 = scalar_select %p819, %s35, 1
        %s821 = smul.addr %s820, 4
        %s822 = smul.addr %s821, 8
        %s823 = scalar_lea.vmem %s13, %s822
        %p824 = pneg %p389
        %p825 = pneg %p386
        %p826 = scmp.lt.s32.totalorder %s35, 1
        %s827 = scalar_select %p826, %s35, 1
        %s828 = scalar_lea.vmem %s14, %s827
        %p829 = pneg %p415
        %p830 = pneg %p412
        %p831 = scmp.lt.s32.totalorder %s35, 1
        %s832 = scalar_select %p831, %s35, 1
        %s833 = smul.addr %s832, 16
        %s834 = smul.addr %s833, 8
        %s835 = scalar_lea.vmem %s15, %s834
        %p836 = pneg %p441
        %p837 = pneg %p438
        %p838 = scmp.lt.s32.totalorder %s35, 1
        %s839 = scalar_select %p838, %s35, 1
        %s840 = scalar_lea.vmem %s16, %s839
        %p841 = pneg %p467
        %p842 = pneg %p464
        %p843 = pneg %p488
        %p844 = pneg %p485
        %p845 = pneg %p509
        %p846 = pneg %p506
        %p847 = pneg %p530
        %p848 = pneg %p527
        %p849 = pneg %p551
        %p850 = pneg %p548
        %p851 = pneg %p577
        %p852 = pneg %p574
        %p853 = scmp.lt.s32.totalorder %s35, 1
        %s854 = scalar_select %p853, %s35, 1
        %s855 = smul.addr %s854, 2
        %s856 = smul.addr %s855, 8
        %s857 = scalar_lea.vmem %s21, %s856
        %p858 = pneg %p603
        %p859 = pneg %p600
        %p860 = scmp.lt.s32.totalorder %s35, 1
        %s861 = scalar_select %p860, %s35, 1
        %s862 = smul.addr %s861, 2
        %s863 = smul.addr %s862, 8
        %s864 = scalar_lea.vmem %s22, %s863
        %p865 = scmp.lt.s32.totalorder %s35, 1
        %s866 = scalar_select %p865, %s35, 1
        %s867 = scalar_lea.vmem %s1, %s866
        %p868 = scmp.lt.s32.totalorder %s35, 1
        %s869 = scalar_select %p868, %s35, 1
        %s870 = scalar_lea.vmem %s2, %s869
        %p871 = scmp.lt.s32.totalorder %s35, 1
        %s872 = scalar_select %p871, %s35, 1
        %s873 = smul.addr %s872, 4
        %s874 = smul.addr %s873, 8
        %s875 = scalar_lea.vmem %s3, %s874
        %p876 = scmp.lt.s32.totalorder %s35, 1
        %s877 = scalar_select %p876, %s35, 1
        %s878 = scalar_lea.vmem %s4, %s877
        %p879 = scmp.lt.s32.totalorder %s35, 1
        %s880 = scalar_select %p879, %s35, 1
        %s881 = smul.addr %s880, 4
        %s882 = smul.addr %s881, 8
        %s883 = scalar_lea.vmem %s5, %s882
        %p884 = scmp.lt.s32.totalorder %s35, 1
        %s885 = scalar_select %p884, %s35, 1
        %s886 = scalar_lea.vmem %s6, %s885
        %p887 = scmp.lt.s32.totalorder %s35, 1
        %s888 = scalar_select %p887, %s35, 1
        %s889 = smul.addr %s888, 4
        %s890 = smul.addr %s889, 8
        %s891 = scalar_lea.vmem %s7, %s890
        %p892 = scmp.lt.s32.totalorder %s35, 1
        %s893 = scalar_select %p892, %s35, 1
        %s894 = scalar_lea.vmem %s8, %s893
        %p895 = scmp.lt.s32.totalorder %s35, 1
        %s896 = scalar_select %p895, %s35, 1
        %s897 = smul.addr %s896, 4
        %s898 = smul.addr %s897, 8
        %s899 = scalar_lea.vmem %s9, %s898
        %p900 = scmp.lt.s32.totalorder %s35, 1
        %s901 = scalar_select %p900, %s35, 1
        %s902 = scalar_lea.vmem %s10, %s901
        %p903 = scmp.lt.s32.totalorder %s35, 1
        %s904 = scalar_select %p903, %s35, 1
        %s905 = scalar_lea.vmem %s11, %s904
        %p906 = scmp.lt.s32.totalorder %s35, 1
        %s907 = scalar_select %p906, %s35, 1
        %s908 = scalar_lea.vmem %s12, %s907
        %p909 = scmp.lt.s32.totalorder %s35, 1
        %s910 = scalar_select %p909, %s35, 1
        %s911 = smul.addr %s910, 4
        %s912 = smul.addr %s911, 8
        %s913 = scalar_lea.vmem %s13, %s912
        %p914 = scmp.lt.s32.totalorder %s35, 1
        %s915 = scalar_select %p914, %s35, 1
        %s916 = scalar_lea.vmem %s14, %s915
        %p917 = scmp.lt.s32.totalorder %s35, 1
        %s918 = scalar_select %p917, %s35, 1
        %s919 = smul.addr %s918, 16
        %s920 = smul.addr %s919, 8
        %s921 = scalar_lea.vmem %s15, %s920
        %p922 = scmp.lt.s32.totalorder %s35, 1
        %s923 = scalar_select %p922, %s35, 1
        %s924 = scalar_lea.vmem %s16, %s923
        %p925 = scmp.lt.s32.totalorder %s35, 1
        %s926 = scalar_select %p925, %s35, 1
        %s927 = smul.addr %s926, 2
        %s928 = smul.addr %s927, 8
        %s929 = scalar_lea.vmem %s21, %s928
        %p930 = scmp.lt.s32.totalorder %s35, 1
        %s931 = scalar_select %p930, %s35, 1
        %s932 = smul.addr %s931, 2
        %s933 = smul.addr %s932, 8
        %s934 = scalar_lea.vmem %s22, %s933
        %p935 = scmp.eq.s32.totalorder %s35, 0
        // Predicated region
        $region101: #{gpt2_forward.1} parent=99 // pred_check
          %p936 = pneg %p935
        $region102: #{gpt2_forward.1} parent=99 // pred_check_branch
          %938 = sbr.rel (%p936) target = $region104
        $region103: #{gpt2_forward.1} parent=99 // pred_region
          %v939 = vld [vmem:[%s0] sm:$0xff]
          %v940 = vld [vmem:[%s0 + $0x8] sm:$0xff]
          %vm941 = vcmask 261120
          %942 = vst.msk [vmem:[#allocation2] sm:$0xff] %vm941, %v939
          %943 = vst.msk [vmem:[#allocation2 + $0x8] sm:$0xff] %vm941, %v940
        $region104: #{gpt2_forward.1} parent=99 // pred_fallthru
          _
        %v944 = vld [vmem:[#allocation2] sm:$0xff]
        %v945 = vld [vmem:[#allocation2 + $0x8] sm:$0xff]
        %v946 = vld [vmem:[%s867] sm:$0x1]
        %v947 = vld [vmem:[%s870] sm:$0x1]
        %vm948 = vcmask 261120
        %v949 = vsel %vm948, %v944, 0.0
        %950 = vadd.xlane.f32.xlu0 %v949
        %v951 = vpop.xlane.xlu0 %950
        %v952 = vsel %vm948, %v945, 0.0
        %953 = vadd.xlane.f32.xlu0 %v952
        %v954 = vpop.xlane.xlu0 %953
        %v955 = vrcp.pop 32.0
        %v956 = vmul.f32 32.0, %v955
        %v957 = vsub.f32 1.0, %v956
        %v958 = vmul.f32 %v955, %v957
        %v959 = vadd.f32 %v955, %v958
        %vm960 = vweird.f32 %v955
        %v961 = vsel %vm960, %v955, %v959
        %v962 = vmul.f32 %v951, %v961
        %v963 = vmul.f32 %v954, %v961
        %v964 = vsub.f32 %v944, %v962
        %v965 = vsub.f32 %v945, %v963
        %v966 = vmul.f32 %v964, %v964
        %v967 = vmul.f32 %v965, %v965
        %v968 = vsel %vm948, %v966, 0.0
        %969 = vadd.xlane.f32.xlu0 %v968
        %v970 = vpop.xlane.xlu0 %969
        %v971 = vsel %vm948, %v967, 0.0
        %972 = vadd.xlane.f32.xlu0 %v971
        %v973 = vpop.xlane.xlu0 %972
        %v974 = vmul.f32 %v970, %v961
        %v975 = vmul.f32 %v973, %v961
        %v976 = vadd.f32 %v974, 1e-05
        %v977 = vadd.f32 %v975, 1e-05
        %v978 = vrsqrt.pop %v976
        %v979 = vmul.f32 %v978, %v976
        %v980 = vmul.f32 %v979, %v978
        %v981 = vmul.f32 0.5, %v980
        %v982 = vsub.f32 1.5, %v981
        %v983 = vmul.f32 %v978, %v982
        %vm984 = vweird.f32 %v976
        %vm985 = vweird.f32 %v978
        %vm986 = vmor %vm984, %vm985
        %v987 = vsel %vm986, %v978, %v983
        %v988 = vrsqrt.pop %v977
        %v989 = vmul.f32 %v988, %v977
        %v990 = vmul.f32 %v989, %v988
        %v991 = vmul.f32 0.5, %v990
        %v992 = vsub.f32 1.5, %v991
        %v993 = vmul.f32 %v988, %v992
        %vm994 = vweird.f32 %v977
        %vm995 = vweird.f32 %v988
        %vm996 = vmor %vm994, %vm995
        %v997 = vsel %vm996, %v988, %v993
        %v998 = vmul.f32 %v964, %v987
        %v999 = vmul.f32 %v965, %v997
        %v1001 = vperm.slane %v946, 0
        %v1003 = vmul.f32 %v998, %v1001
        %v1004 = vmul.f32 %v999, %v1001
        %v1006 = vperm.slane %v947, 0
        %v1008 = vadd.f32 %v1003, %v1006
        %v1009 = vadd.f32 %v1004, %v1006
        %v1010 = vld [vmem:[%s875] sm:$0xff]
        %v1011 = vld [vmem:[%s875 + $0x8] sm:$0xff]
        %v1012 = vld [vmem:[%s875 + $0x10] sm:$0xff]
        %v1013 = vld [vmem:[%s875 + $0x18] sm:$0xff]
        %v1014 = vld [vmem:[%s878] sm:$0x1]
        %v1016 = vperm.slane %v1014, 0
        %v1019 = vsel %vm948, %v1008, 0
        %v1022 = vsel %vm948, %v1009, 0
        %1024 = vmatpush.msra.mxu0 0.0
        %1025 = vmatpush.msra.mxu0 0.0
        %1026 = vmatpush.msra.mxu0 0.0
        %1027 = vmatpush.msra.mxu0 0.0
        %1028 = vmatpush.msra.mxu0 0.0
        %1029 = vmatpush.msra.mxu0 0.0
        %1030 = vmatpush.msra.mxu0 0.0
        %1031 = vmatpush.msra.mxu0 0.0
        %1032 = vmatpush.msra.mxu0 0.0
        %1033 = vmatpush.msra.mxu0 0.0
        %1034 = vmatpush.msra.mxu0 0.0
        %1035 = vmatpush.msra.mxu0 0.0
        %1036 = vmatpush.msra.mxu0 %v1013
        %1037 = vmatpush.msra.mxu0 %v1012
        %1038 = vmatpush.msra.mxu0 %v1011
        %1039 = vmatpush.msra.mxu0 %v1010
        %1040 = vmatmul.f32.gmra.mxu0 %v1019
        %v1041 = vpop.f32.mrf.mxu0
        %v1042 = vadd.f32 %v1016, %v1041
        %1043 = vmatmul.f32.gmra.mxu0 %v1022
        %v1044 = vpop.f32.mrf.mxu0
        %v1045 = vadd.f32 %v1016, %v1044
        %1046 = vdwg.mxu0
        %v1047 = vld [vmem:[%s883] sm:$0xff]
        %v1048 = vld [vmem:[%s883 + $0x8] sm:$0xff]
        %v1049 = vld [vmem:[%s883 + $0x10] sm:$0xff]
        %v1050 = vld [vmem:[%s883 + $0x18] sm:$0xff]
        %v1051 = vld [vmem:[%s886] sm:$0x1]
        %v1053 = vperm.slane %v1051, 0
        %1055 = vmatpush.msra.mxu0 0.0
        %1056 = vmatpush.msra.mxu0 0.0
        %1057 = vmatpush.msra.mxu0 0.0
        %1058 = vmatpush.msra.mxu0 0.0
        %1059 = vmatpush.msra.mxu0 0.0
        %1060 = vmatpush.msra.mxu0 0.0
        %1061 = vmatpush.msra.mxu0 0.0
        %1062 = vmatpush.msra.mxu0 0.0
        %1063 = vmatpush.msra.mxu0 0.0
        %1064 = vmatpush.msra.mxu0 0.0
        %1065 = vmatpush.msra.mxu0 0.0
        %1066 = vmatpush.msra.mxu0 0.0
        %1067 = vmatpush.msra.mxu0 %v1050
        %1068 = vmatpush.msra.mxu0 %v1049
        %1069 = vmatpush.msra.mxu0 %v1048
        %1070 = vmatpush.msra.mxu0 %v1047
        %1071 = vmatmul.f32.gmra.mxu0 %v1019
        %v1072 = vpop.f32.mrf.mxu0
        %v1073 = vadd.f32 %v1053, %v1072
        %1074 = vmatmul.f32.gmra.mxu0 %v1022
        %v1075 = vpop.f32.mrf.mxu0
        %v1076 = vadd.f32 %v1053, %v1075
        %1077 = vdwg.mxu0
        %v1078 = vld [vmem:[%s891] sm:$0xff]
        %v1079 = vld [vmem:[%s891 + $0x8] sm:$0xff]
        %v1080 = vld [vmem:[%s891 + $0x10] sm:$0xff]
        %v1081 = vld [vmem:[%s891 + $0x18] sm:$0xff]
        %v1082 = vld [vmem:[%s894] sm:$0x1]
        %v1084 = vperm.slane %v1082, 0
        %1086 = vmatpush.msra.mxu0 0.0
        %1087 = vmatpush.msra.mxu0 0.0
        %1088 = vmatpush.msra.mxu0 0.0
        %1089 = vmatpush.msra.mxu0 0.0
        %1090 = vmatpush.msra.mxu0 0.0
        %1091 = vmatpush.msra.mxu0 0.0
        %1092 = vmatpush.msra.mxu0 0.0
        %1093 = vmatpush.msra.mxu0 0.0
        %1094 = vmatpush.msra.mxu0 0.0
        %1095 = vmatpush.msra.mxu0 0.0
        %1096 = vmatpush.msra.mxu0 0.0
        %1097 = vmatpush.msra.mxu0 0.0
        %1098 = vmatpush.msra.mxu0 %v1081
        %1099 = vmatpush.msra.mxu0 %v1080
        %1100 = vmatpush.msra.mxu0 %v1079
        %1101 = vmatpush.msra.mxu0 %v1078
        %1102 = vmatmul.f32.gmra.mxu0 %v1019
        %v1103 = vpop.f32.mrf.mxu0
        %v1104 = vadd.f32 %v1084, %v1103
        %1105 = vmatmul.f32.gmra.mxu0 %v1022
        %v1106 = vpop.f32.mrf.mxu0
        %v1107 = vadd.f32 %v1084, %v1106
        %1108 = vdwg.mxu0
        %1109 = vst.msk [vmem:[%s929] sm:$0xff] %vm948, %v1073
        %1110 = vst.msk [vmem:[%s929 + $0x8] sm:$0xff] %vm948, %v1076
        %1111 = vst.msk [vmem:[%s934] sm:$0xff] %vm948, %v1104
        %1112 = vst.msk [vmem:[%s934 + $0x8] sm:$0xff] %vm948, %v1107
        %1115 = vrot.lane.b32.xlu0 %v1042, 120
        %v1116 = vpop.permute.xlu0 %1115
        %1117 = vrot.lane.b32.xlu0 %v1045, 120
        %v1118 = vpop.permute.xlu0 %1117
        %1119 = vrot.lane.b32.xlu0 %v1042, 112
        %v1120 = vpop.permute.xlu0 %1119
        %1121 = vrot.lane.b32.xlu0 %v1045, 112
        %v1122 = vpop.permute.xlu0 %1121
        %1123 = vrot.lane.b32.xlu0 %v1042, 104
        %v1124 = vpop.permute.xlu0 %1123
        %1125 = vrot.lane.b32.xlu0 %v1045, 104
        %v1126 = vpop.permute.xlu0 %1125
        %1129 = vrot.lane.b32.xlu0 %v1073, 120
        %v1130 = vpop.permute.xlu0 %1129
        %1131 = vrot.lane.b32.xlu0 %v1076, 120
        %v1132 = vpop.permute.xlu0 %1131
        %1133 = vrot.lane.b32.xlu0 %v1073, 112
        %v1134 = vpop.permute.xlu0 %1133
        %1135 = vrot.lane.b32.xlu0 %v1076, 112
        %v1136 = vpop.permute.xlu0 %1135
        %1137 = vrot.lane.b32.xlu0 %v1073, 104
        %v1138 = vpop.permute.xlu0 %1137
        %1139 = vrot.lane.b32.xlu0 %v1076, 104
        %v1140 = vpop.permute.xlu0 %1139
        %1143 = vrot.lane.b32.xlu0 %v1104, 120
        %v1144 = vpop.permute.xlu0 %1143
        %1145 = vrot.lane.b32.xlu0 %v1107, 120
        %v1146 = vpop.permute.xlu0 %1145
        %1149 = vrot.lane.b32.xlu0 %v1104, 112
        %v1150 = vpop.permute.xlu0 %1149
        %1151 = vrot.lane.b32.xlu0 %v1107, 112
        %v1152 = vpop.permute.xlu0 %1151
        %1155 = vrot.lane.b32.xlu0 %v1104, 104
        %v1156 = vpop.permute.xlu0 %1155
        %1157 = vrot.lane.b32.xlu0 %v1107, 104
        %v1158 = vpop.permute.xlu0 %1157
        %vm1161 = vcmask 64512
        %v1162 = vsel %vm1161, %v1042, 0
        %v1164 = vsel %vm1161, %v1073, 0
        %1166 = vmatpush.xpose.msra.mxu0 0.0
        %1167 = vmatpush.xpose.msra.mxu0 0.0
        %1168 = vmatpush.xpose.msra.mxu0 0.0
        %1169 = vmatpush.xpose.msra.mxu0 0.0
        %1170 = vmatpush.xpose.msra.mxu0 0.0
        %1171 = vmatpush.xpose.msra.mxu0 0.0
        %1172 = vmatpush.xpose.msra.mxu0 0.0
        %1173 = vmatpush.xpose.msra.mxu0 0.0
        %1174 = vmatpush.xpose.msra.mxu0 0.0
        %1175 = vmatpush.xpose.msra.mxu0 0.0
        %1176 = vmatpush.xpose.msra.mxu0 0.0
        %1177 = vmatpush.xpose.msra.mxu0 0.0
        %1178 = vmatpush.xpose.msra.mxu0 0.0
        %1179 = vmatpush.xpose.msra.mxu0 0.0
        %1180 = vmatpush.xpose.msra.mxu0 0.0
        %1181 = vmatpush.xpose.msra.mxu0 %v1164
        %1182 = vmatmul.f32.gmra.mxu0 %v1162
        %v1183 = vpop.f32.mrf.mxu0
        %v1184 = vadd.f32 0.0, %v1183
        %1185 = vdwg.mxu0
        %v1186 = vsel %vm1161, %v1045, 0
        %v1188 = vsel %vm1161, %v1076, 0
        %1190 = vmatpush.xpose.msra.mxu0 0.0
        %1191 = vmatpush.xpose.msra.mxu0 0.0
        %1192 = vmatpush.xpose.msra.mxu0 0.0
        %1193 = vmatpush.xpose.msra.mxu0 0.0
        %1194 = vmatpush.xpose.msra.mxu0 0.0
        %1195 = vmatpush.xpose.msra.mxu0 0.0
        %1196 = vmatpush.xpose.msra.mxu0 0.0
        %1197 = vmatpush.xpose.msra.mxu0 0.0
        %1198 = vmatpush.xpose.msra.mxu0 0.0
        %1199 = vmatpush.xpose.msra.mxu0 0.0
        %1200 = vmatpush.xpose.msra.mxu0 0.0
        %1201 = vmatpush.xpose.msra.mxu0 0.0
        %1202 = vmatpush.xpose.msra.mxu0 0.0
        %1203 = vmatpush.xpose.msra.mxu0 0.0
        %1204 = vmatpush.xpose.msra.mxu0 0.0
        %1205 = vmatpush.xpose.msra.mxu0 %v1188
        %1206 = vmatmul.f32.gmra.mxu0 %v1186
        %v1207 = vpop.f32.mrf.mxu0
        %v1208 = vadd.f32 0.0, %v1207
        %1209 = vdwg.mxu0
        %v1210 = vsel %vm1161, %v1116, 0
        %v1212 = vsel %vm1161, %v1130, 0
        %1214 = vmatpush.xpose.msra.mxu0 0.0
        %1215 = vmatpush.xpose.msra.mxu0 0.0
        %1216 = vmatpush.xpose.msra.mxu0 0.0
        %1217 = vmatpush.xpose.msra.mxu0 0.0
        %1218 = vmatpush.xpose.msra.mxu0 0.0
        %1219 = vmatpush.xpose.msra.mxu0 0.0
        %1220 = vmatpush.xpose.msra.mxu0 0.0
        %1221 = vmatpush.xpose.msra.mxu0 0.0
        %1222 = vmatpush.xpose.msra.mxu0 0.0
        %1223 = vmatpush.xpose.msra.mxu0 0.0
        %1224 = vmatpush.xpose.msra.mxu0 0.0
        %1225 = vmatpush.xpose.msra.mxu0 0.0
        %1226 = vmatpush.xpose.msra.mxu0 0.0
        %1227 = vmatpush.xpose.msra.mxu0 0.0
        %1228 = vmatpush.xpose.msra.mxu0 0.0
        %1229 = vmatpush.xpose.msra.mxu0 %v1212
        %1230 = vmatmul.f32.gmra.mxu0 %v1210
        %v1231 = vpop.f32.mrf.mxu0
        %v1232 = vadd.f32 0.0, %v1231
        %1233 = vdwg.mxu0
        %v1234 = vsel %vm1161, %v1118, 0
        %v1236 = vsel %vm1161, %v1132, 0
        %1238 = vmatpush.xpose.msra.mxu0 0.0
        %1239 = vmatpush.xpose.msra.mxu0 0.0
        %1240 = vmatpush.xpose.msra.mxu0 0.0
        %1241 = vmatpush.xpose.msra.mxu0 0.0
        %1242 = vmatpush.xpose.msra.mxu0 0.0
        %1243 = vmatpush.xpose.msra.mxu0 0.0
        %1244 = vmatpush.xpose.msra.mxu0 0.0
        %1245 = vmatpush.xpose.msra.mxu0 0.0
        %1246 = vmatpush.xpose.msra.mxu0 0.0
        %1247 = vmatpush.xpose.msra.mxu0 0.0
        %1248 = vmatpush.xpose.msra.mxu0 0.0
        %1249 = vmatpush.xpose.msra.mxu0 0.0
        %1250 = vmatpush.xpose.msra.mxu0 0.0
        %1251 = vmatpush.xpose.msra.mxu0 0.0
        %1252 = vmatpush.xpose.msra.mxu0 0.0
        %1253 = vmatpush.xpose.msra.mxu0 %v1236
        %1254 = vmatmul.f32.gmra.mxu0 %v1234
        %v1255 = vpop.f32.mrf.mxu0
        %v1256 = vadd.f32 0.0, %v1255
        %1257 = vdwg.mxu0
        %v1258 = vsel %vm1161, %v1120, 0
        %v1260 = vsel %vm1161, %v1134, 0
        %1262 = vmatpush.xpose.msra.mxu0 0.0
        %1263 = vmatpush.xpose.msra.mxu0 0.0
        %1264 = vmatpush.xpose.msra.mxu0 0.0
        %1265 = vmatpush.xpose.msra.mxu0 0.0
        %1266 = vmatpush.xpose.msra.mxu0 0.0
        %1267 = vmatpush.xpose.msra.mxu0 0.0
        %1268 = vmatpush.xpose.msra.mxu0 0.0
        %1269 = vmatpush.xpose.msra.mxu0 0.0
        %1270 = vmatpush.xpose.msra.mxu0 0.0
        %1271 = vmatpush.xpose.msra.mxu0 0.0
        %1272 = vmatpush.xpose.msra.mxu0 0.0
        %1273 = vmatpush.xpose.msra.mxu0 0.0
        %1274 = vmatpush.xpose.msra.mxu0 0.0
        %1275 = vmatpush.xpose.msra.mxu0 0.0
        %1276 = vmatpush.xpose.msra.mxu0 0.0
        %1277 = vmatpush.xpose.msra.mxu0 %v1260
        %1278 = vmatmul.f32.gmra.mxu0 %v1258
        %v1279 = vpop.f32.mrf.mxu0
        %v1280 = vadd.f32 0.0, %v1279
        %1281 = vdwg.mxu0
        %v1282 = vsel %vm1161, %v1122, 0
        %v1284 = vsel %vm1161, %v1136, 0
        %1286 = vmatpush.xpose.msra.mxu0 0.0
        %1287 = vmatpush.xpose.msra.mxu0 0.0
        %1288 = vmatpush.xpose.msra.mxu0 0.0
        %1289 = vmatpush.xpose.msra.mxu0 0.0
        %1290 = vmatpush.xpose.msra.mxu0 0.0
        %1291 = vmatpush.xpose.msra.mxu0 0.0
        %1292 = vmatpush.xpose.msra.mxu0 0.0
        %1293 = vmatpush.xpose.msra.mxu0 0.0
        %1294 = vmatpush.xpose.msra.mxu0 0.0
        %1295 = vmatpush.xpose.msra.mxu0 0.0
        %1296 = vmatpush.xpose.msra.mxu0 0.0
        %1297 = vmatpush.xpose.msra.mxu0 0.0
        %1298 = vmatpush.xpose.msra.mxu0 0.0
        %1299 = vmatpush.xpose.msra.mxu0 0.0
        %1300 = vmatpush.xpose.msra.mxu0 0.0
        %1301 = vmatpush.xpose.msra.mxu0 %v1284
        %1302 = vmatmul.f32.gmra.mxu0 %v1282
        %v1303 = vpop.f32.mrf.mxu0
        %v1304 = vadd.f32 0.0, %v1303
        %1305 = vdwg.mxu0
        %v1306 = vsel %vm1161, %v1124, 0
        %v1308 = vsel %vm1161, %v1138, 0
        %1310 = vmatpush.xpose.msra.mxu0 0.0
        %1311 = vmatpush.xpose.msra.mxu0 0.0
        %1312 = vmatpush.xpose.msra.mxu0 0.0
        %1313 = vmatpush.xpose.msra.mxu0 0.0
        %1314 = vmatpush.xpose.msra.mxu0 0.0
        %1315 = vmatpush.xpose.msra.mxu0 0.0
        %1316 = vmatpush.xpose.msra.mxu0 0.0
        %1317 = vmatpush.xpose.msra.mxu0 0.0
        %1318 = vmatpush.xpose.msra.mxu0 0.0
        %1319 = vmatpush.xpose.msra.mxu0 0.0
        %1320 = vmatpush.xpose.msra.mxu0 0.0
        %1321 = vmatpush.xpose.msra.mxu0 0.0
        %1322 = vmatpush.xpose.msra.mxu0 0.0
        %1323 = vmatpush.xpose.msra.mxu0 0.0
        %1324 = vmatpush.xpose.msra.mxu0 0.0
        %1325 = vmatpush.xpose.msra.mxu0 %v1308
        %1326 = vmatmul.f32.gmra.mxu0 %v1306
        %v1327 = vpop.f32.mrf.mxu0
        %v1328 = vadd.f32 0.0, %v1327
        %1329 = vdwg.mxu0
        %v1330 = vsel %vm1161, %v1126, 0
        %v1332 = vsel %vm1161, %v1140, 0
        %1334 = vmatpush.xpose.msra.mxu0 0.0
        %1335 = vmatpush.xpose.msra.mxu0 0.0
        %1336 = vmatpush.xpose.msra.mxu0 0.0
        %1337 = vmatpush.xpose.msra.mxu0 0.0
        %1338 = vmatpush.xpose.msra.mxu0 0.0
        %1339 = vmatpush.xpose.msra.mxu0 0.0
        %1340 = vmatpush.xpose.msra.mxu0 0.0
        %1341 = vmatpush.xpose.msra.mxu0 0.0
        %1342 = vmatpush.xpose.msra.mxu0 0.0
        %1343 = vmatpush.xpose.msra.mxu0 0.0
        %1344 = vmatpush.xpose.msra.mxu0 0.0
        %1345 = vmatpush.xpose.msra.mxu0 0.0
        %1346 = vmatpush.xpose.msra.mxu0 0.0
        %1347 = vmatpush.xpose.msra.mxu0 0.0
        %1348 = vmatpush.xpose.msra.mxu0 0.0
        %1349 = vmatpush.xpose.msra.mxu0 %v1332
        %1350 = vmatmul.f32.gmra.mxu0 %v1330
        %v1351 = vpop.f32.mrf.mxu0
        %v1352 = vadd.f32 0.0, %v1351
        %1353 = vdwg.mxu0
        %v1354 = vmul.f32 %v1184, 0.35355338
        %v1355 = vmul.f32 %v1208, 0.35355338
        %v1356 = vmul.f32 %v1232, 0.35355338
        %v1357 = vmul.f32 %v1256, 0.35355338
        %v1358 = vmul.f32 %v1280, 0.35355338
        %v1359 = vmul.f32 %v1304, 0.35355338
        %v1360 = vmul.f32 %v1328, 0.35355338
        %v1361 = vmul.f32 %v1352, 0.35355338
        %v1362 = vlaneseq
        %v1363 = vshrl.u32 %v1362, 7
        %v1364 = vlaneseq
        %v1365 = vand.u32 %v1364, 127
        %vm1366 = vcmp.le.s32.totalorder %v1365, %v1363
        %v1367 = vsel %vm1366, 1, 0
        %vm1368 = vcmp.eq.s32.totalorder %v1367, 1
        %v1369 = vsel %vm1368, %v1354, -3.4028235e+38
        %v1370 = vsel %vm1368, %v1355, -3.4028235e+38
        %v1371 = vsel %vm1368, %v1356, -3.4028235e+38
        %v1372 = vsel %vm1368, %v1357, -3.4028235e+38
        %v1373 = vsel %vm1368, %v1358, -3.4028235e+38
        %v1374 = vsel %vm1368, %v1359, -3.4028235e+38
        %v1375 = vsel %vm1368, %v1360, -3.4028235e+38
        %v1376 = vsel %vm1368, %v1361, -3.4028235e+38
        %v1377 = vsel %vm1161, %v1369, -inf
        %1378 = vmax.xlane.f32.xlu0 %v1377
        %v1379 = vpop.xlane.xlu0 %1378
        %v1380 = vsel %vm1161, %v1370, -inf
        %1381 = vmax.xlane.f32.xlu0 %v1380
        %v1382 = vpop.xlane.xlu0 %1381
        %v1383 = vsel %vm1161, %v1371, -inf
        %1384 = vmax.xlane.f32.xlu0 %v1383
        %v1385 = vpop.xlane.xlu0 %1384
        %v1386 = vsel %vm1161, %v1372, -inf
        %1387 = vmax.xlane.f32.xlu0 %v1386
        %v1388 = vpop.xlane.xlu0 %1387
        %v1389 = vsel %vm1161, %v1373, -inf
        %1390 = vmax.xlane.f32.xlu0 %v1389
        %v1391 = vpop.xlane.xlu0 %1390
        %v1392 = vsel %vm1161, %v1374, -inf
        %1393 = vmax.xlane.f32.xlu0 %v1392
        %v1394 = vpop.xlane.xlu0 %1393
        %v1395 = vsel %vm1161, %v1375, -inf
        %1396 = vmax.xlane.f32.xlu0 %v1395
        %v1397 = vpop.xlane.xlu0 %1396
        %v1398 = vsel %vm1161, %v1376, -inf
        %1399 = vmax.xlane.f32.xlu0 %v1398
        %v1400 = vpop.xlane.xlu0 %1399
        %v1401 = vsub.f32 %v1369, %v1379
        %v1402 = vsub.f32 %v1370, %v1382
        %v1403 = vsub.f32 %v1371, %v1385
        %v1404 = vsub.f32 %v1372, %v1388
        %v1405 = vsub.f32 %v1373, %v1391
        %v1406 = vsub.f32 %v1374, %v1394
        %v1407 = vsub.f32 %v1375, %v1397
        %v1408 = vsub.f32 %v1376, %v1400
        %v1409 = vmul.f32 %v1401, 1.442695
        %v1410 = vpow.pop %v1409
        %v1411 = vmul.f32 %v1402, 1.442695
        %v1412 = vpow.pop %v1411
        %v1413 = vmul.f32 %v1403, 1.442695
        %v1414 = vpow.pop %v1413
        %v1415 = vmul.f32 %v1404, 1.442695
        %v1416 = vpow.pop %v1415
        %v1417 = vmul.f32 %v1405, 1.442695
        %v1418 = vpow.pop %v1417
        %v1419 = vmul.f32 %v1406, 1.442695
        %v1420 = vpow.pop %v1419
        %v1421 = vmul.f32 %v1407, 1.442695
        %v1422 = vpow.pop %v1421
        %v1423 = vmul.f32 %v1408, 1.442695
        %v1424 = vpow.pop %v1423
        %v1425 = vsel %vm1161, %v1410, 0.0
        %1426 = vadd.xlane.f32.xlu0 %v1425
        %v1427 = vpop.xlane.xlu0 %1426
        %v1428 = vsel %vm1161, %v1412, 0.0
        %1429 = vadd.xlane.f32.xlu0 %v1428
        %v1430 = vpop.xlane.xlu0 %1429
        %v1431 = vsel %vm1161, %v1414, 0.0
        %1432 = vadd.xlane.f32.xlu0 %v1431
        %v1433 = vpop.xlane.xlu0 %1432
        %v1434 = vsel %vm1161, %v1416, 0.0
        %1435 = vadd.xlane.f32.xlu0 %v1434
        %v1436 = vpop.xlane.xlu0 %1435
        %v1437 = vsel %vm1161, %v1418, 0.0
        %1438 = vadd.xlane.f32.xlu0 %v1437
        %v1439 = vpop.xlane.xlu0 %1438
        %v1440 = vsel %vm1161, %v1420, 0.0
        %1441 = vadd.xlane.f32.xlu0 %v1440
        %v1442 = vpop.xlane.xlu0 %1441
        %v1443 = vsel %vm1161, %v1422, 0.0
        %1444 = vadd.xlane.f32.xlu0 %v1443
        %v1445 = vpop.xlane.xlu0 %1444
        %v1446 = vsel %vm1161, %v1424, 0.0
        %1447 = vadd.xlane.f32.xlu0 %v1446
        %v1448 = vpop.xlane.xlu0 %1447
        %v1449 = vrcp.pop %v1427
        %v1450 = vmul.f32 %v1427, %v1449
        %v1451 = vsub.f32 1.0, %v1450
        %v1452 = vmul.f32 %v1449, %v1451
        %v1453 = vadd.f32 %v1449, %v1452
        %vm1454 = vweird.f32 %v1427
        %vm1455 = vweird.f32 %v1449
        %vm1456 = vmor %vm1454, %vm1455
        %v1457 = vsel %vm1456, %v1449, %v1453
        %v1458 = vand.u32 2147483647, %v1427
        %vm1459 = vcmp.eq.f32.partialorder %v1458, 8.507059e+37
        %v1460 = vand.u32 %v1427, 2147483648
        %v1461 = vor.u32 1.1754944e-38, %v1460
        %v1462 = vsel %vm1459, %v1461, %v1457
        %v1463 = vmul.f32 %v1410, %v1462
        %v1464 = vrcp.pop %v1430
        %v1465 = vmul.f32 %v1430, %v1464
        %v1466 = vsub.f32 1.0, %v1465
        %v1467 = vmul.f32 %v1464, %v1466
        %v1468 = vadd.f32 %v1464, %v1467
        %vm1469 = vweird.f32 %v1430
        %vm1470 = vweird.f32 %v1464
        %vm1471 = vmor %vm1469, %vm1470
        %v1472 = vsel %vm1471, %v1464, %v1468
        %v1473 = vand.u32 2147483647, %v1430
        %vm1474 = vcmp.eq.f32.partialorder %v1473, 8.507059e+37
        %v1475 = vand.u32 %v1430, 2147483648
        %v1476 = vor.u32 1.1754944e-38, %v1475
        %v1477 = vsel %vm1474, %v1476, %v1472
        %v1478 = vmul.f32 %v1412, %v1477
        %v1479 = vrcp.pop %v1433
        %v1480 = vmul.f32 %v1433, %v1479
        %v1481 = vsub.f32 1.0, %v1480
        %v1482 = vmul.f32 %v1479, %v1481
        %v1483 = vadd.f32 %v1479, %v1482
        %vm1484 = vweird.f32 %v1433
        %vm1485 = vweird.f32 %v1479
        %vm1486 = vmor %vm1484, %vm1485
        %v1487 = vsel %vm1486, %v1479, %v1483
        %v1488 = vand.u32 2147483647, %v1433
        %vm1489 = vcmp.eq.f32.partialorder %v1488, 8.507059e+37
        %v1490 = vand.u32 %v1433, 2147483648
        %v1491 = vor.u32 1.1754944e-38, %v1490
        %v1492 = vsel %vm1489, %v1491, %v1487
        %v1493 = vmul.f32 %v1414, %v1492
        %v1494 = vrcp.pop %v1436
        %v1495 = vmul.f32 %v1436, %v1494
        %v1496 = vsub.f32 1.0, %v1495
        %v1497 = vmul.f32 %v1494, %v1496
        %v1498 = vadd.f32 %v1494, %v1497
        %vm1499 = vweird.f32 %v1436
        %vm1500 = vweird.f32 %v1494
        %vm1501 = vmor %vm1499, %vm1500
        %v1502 = vsel %vm1501, %v1494, %v1498
        %v1503 = vand.u32 2147483647, %v1436
        %vm1504 = vcmp.eq.f32.partialorder %v1503, 8.507059e+37
        %v1505 = vand.u32 %v1436, 2147483648
        %v1506 = vor.u32 1.1754944e-38, %v1505
        %v1507 = vsel %vm1504, %v1506, %v1502
        %v1508 = vmul.f32 %v1416, %v1507
        %v1509 = vrcp.pop %v1439
        %v1510 = vmul.f32 %v1439, %v1509
        %v1511 = vsub.f32 1.0, %v1510
        %v1512 = vmul.f32 %v1509, %v1511
        %v1513 = vadd.f32 %v1509, %v1512
        %vm1514 = vweird.f32 %v1439
        %vm1515 = vweird.f32 %v1509
        %vm1516 = vmor %vm1514, %vm1515
        %v1517 = vsel %vm1516, %v1509, %v1513
        %v1518 = vand.u32 2147483647, %v1439
        %vm1519 = vcmp.eq.f32.partialorder %v1518, 8.507059e+37
        %v1520 = vand.u32 %v1439, 2147483648
        %v1521 = vor.u32 1.1754944e-38, %v1520
        %v1522 = vsel %vm1519, %v1521, %v1517
        %v1523 = vmul.f32 %v1418, %v1522
        %v1524 = vrcp.pop %v1442
        %v1525 = vmul.f32 %v1442, %v1524
        %v1526 = vsub.f32 1.0, %v1525
        %v1527 = vmul.f32 %v1524, %v1526
        %v1528 = vadd.f32 %v1524, %v1527
        %vm1529 = vweird.f32 %v1442
        %vm1530 = vweird.f32 %v1524
        %vm1531 = vmor %vm1529, %vm1530
        %v1532 = vsel %vm1531, %v1524, %v1528
        %v1533 = vand.u32 2147483647, %v1442
        %vm1534 = vcmp.eq.f32.partialorder %v1533, 8.507059e+37
        %v1535 = vand.u32 %v1442, 2147483648
        %v1536 = vor.u32 1.1754944e-38, %v1535
        %v1537 = vsel %vm1534, %v1536, %v1532
        %v1538 = vmul.f32 %v1420, %v1537
        %v1539 = vrcp.pop %v1445
        %v1540 = vmul.f32 %v1445, %v1539
        %v1541 = vsub.f32 1.0, %v1540
        %v1542 = vmul.f32 %v1539, %v1541
        %v1543 = vadd.f32 %v1539, %v1542
        %vm1544 = vweird.f32 %v1445
        %vm1545 = vweird.f32 %v1539
        %vm1546 = vmor %vm1544, %vm1545
        %v1547 = vsel %vm1546, %v1539, %v1543
        %v1548 = vand.u32 2147483647, %v1445
        %vm1549 = vcmp.eq.f32.partialorder %v1548, 8.507059e+37
        %v1550 = vand.u32 %v1445, 2147483648
        %v1551 = vor.u32 1.1754944e-38, %v1550
        %v1552 = vsel %vm1549, %v1551, %v1547
        %v1553 = vmul.f32 %v1422, %v1552
        %v1554 = vrcp.pop %v1448
        %v1555 = vmul.f32 %v1448, %v1554
        %v1556 = vsub.f32 1.0, %v1555
        %v1557 = vmul.f32 %v1554, %v1556
        %v1558 = vadd.f32 %v1554, %v1557
        %vm1559 = vweird.f32 %v1448
        %vm1560 = vweird.f32 %v1554
        %vm1561 = vmor %vm1559, %vm1560
        %v1562 = vsel %vm1561, %v1554, %v1558
        %v1563 = vand.u32 2147483647, %v1448
        %vm1564 = vcmp.eq.f32.partialorder %v1563, 8.507059e+37
        %v1565 = vand.u32 %v1448, 2147483648
        %v1566 = vor.u32 1.1754944e-38, %v1565
        %v1567 = vsel %vm1564, %v1566, %v1562
        %v1568 = vmul.f32 %v1424, %v1567
        %v1570 = vsel %vm1161, %v1463, 0
        %1572 = vmatpush.msra.mxu0 0.0
        %1573 = vmatpush.msra.mxu0 0.0
        %1574 = vmatpush.msra.mxu0 0.0
        %1575 = vmatpush.msra.mxu0 0.0
        %1576 = vmatpush.msra.mxu0 0.0
        %1577 = vmatpush.msra.mxu0 0.0
        %1578 = vmatpush.msra.mxu0 0.0
        %1579 = vmatpush.msra.mxu0 0.0
        %1580 = vmatpush.msra.mxu0 0.0
        %1581 = vmatpush.msra.mxu0 0.0
        %1582 = vmatpush.msra.mxu0 0.0
        %1583 = vmatpush.msra.mxu0 0.0
        %1584 = vmatpush.msra.mxu0 0.0
        %1585 = vmatpush.msra.mxu0 0.0
        %1586 = vmatpush.msra.mxu0 0.0
        %1587 = vmatpush.msra.mxu0 %v1104
        %1588 = vmatmul.f32.gmra.mxu0 %v1570
        %v1589 = vpop.f32.mrf.mxu0
        %v1590 = vadd.f32 0.0, %v1589
        %1591 = vdwg.mxu0
        %v1593 = vsel %vm1161, %v1478, 0
        %1595 = vmatpush.msra.mxu0 0.0
        %1596 = vmatpush.msra.mxu0 0.0
        %1597 = vmatpush.msra.mxu0 0.0
        %1598 = vmatpush.msra.mxu0 0.0
        %1599 = vmatpush.msra.mxu0 0.0
        %1600 = vmatpush.msra.mxu0 0.0
        %1601 = vmatpush.msra.mxu0 0.0
        %1602 = vmatpush.msra.mxu0 0.0
        %1603 = vmatpush.msra.mxu0 0.0
        %1604 = vmatpush.msra.mxu0 0.0
        %1605 = vmatpush.msra.mxu0 0.0
        %1606 = vmatpush.msra.mxu0 0.0
        %1607 = vmatpush.msra.mxu0 0.0
        %1608 = vmatpush.msra.mxu0 0.0
        %1609 = vmatpush.msra.mxu0 0.0
        %1610 = vmatpush.msra.mxu0 %v1107
        %1611 = vmatmul.f32.gmra.mxu0 %v1593
        %v1612 = vpop.f32.mrf.mxu0
        %v1613 = vadd.f32 0.0, %v1612
        %1614 = vdwg.mxu0
        %v1616 = vsel %vm1161, %v1493, 0
        %1618 = vmatpush.msra.mxu0 0.0
        %1619 = vmatpush.msra.mxu0 0.0
        %1620 = vmatpush.msra.mxu0 0.0
        %1621 = vmatpush.msra.mxu0 0.0
        %1622 = vmatpush.msra.mxu0 0.0
        %1623 = vmatpush.msra.mxu0 0.0
        %1624 = vmatpush.msra.mxu0 0.0
        %1625 = vmatpush.msra.mxu0 0.0
        %1626 = vmatpush.msra.mxu0 0.0
        %1627 = vmatpush.msra.mxu0 0.0
        %1628 = vmatpush.msra.mxu0 0.0
        %1629 = vmatpush.msra.mxu0 0.0
        %1630 = vmatpush.msra.mxu0 0.0
        %1631 = vmatpush.msra.mxu0 0.0
        %1632 = vmatpush.msra.mxu0 0.0
        %1633 = vmatpush.msra.mxu0 %v1144
        %1634 = vmatmul.f32.gmra.mxu0 %v1616
        %v1635 = vpop.f32.mrf.mxu0
        %v1636 = vadd.f32 0.0, %v1635
        %1637 = vdwg.mxu0
        %v1639 = vsel %vm1161, %v1508, 0
        %1641 = vmatpush.msra.mxu0 0.0
        %1642 = vmatpush.msra.mxu0 0.0
        %1643 = vmatpush.msra.mxu0 0.0
        %1644 = vmatpush.msra.mxu0 0.0
        %1645 = vmatpush.msra.mxu0 0.0
        %1646 = vmatpush.msra.mxu0 0.0
        %1647 = vmatpush.msra.mxu0 0.0
        %1648 = vmatpush.msra.mxu0 0.0
        %1649 = vmatpush.msra.mxu0 0.0
        %1650 = vmatpush.msra.mxu0 0.0
        %1651 = vmatpush.msra.mxu0 0.0
        %1652 = vmatpush.msra.mxu0 0.0
        %1653 = vmatpush.msra.mxu0 0.0
        %1654 = vmatpush.msra.mxu0 0.0
        %1655 = vmatpush.msra.mxu0 0.0
        %1656 = vmatpush.msra.mxu0 %v1146
        %1657 = vmatmul.f32.gmra.mxu0 %v1639
        %v1658 = vpop.f32.mrf.mxu0
        %v1659 = vadd.f32 0.0, %v1658
        %1660 = vdwg.mxu0
        %v1662 = vsel %vm1161, %v1523, 0
        %1664 = vmatpush.msra.mxu0 0.0
        %1665 = vmatpush.msra.mxu0 0.0
        %1666 = vmatpush.msra.mxu0 0.0
        %1667 = vmatpush.msra.mxu0 0.0
        %1668 = vmatpush.msra.mxu0 0.0
        %1669 = vmatpush.msra.mxu0 0.0
        %1670 = vmatpush.msra.mxu0 0.0
        %1671 = vmatpush.msra.mxu0 0.0
        %1672 = vmatpush.msra.mxu0 0.0
        %1673 = vmatpush.msra.mxu0 0.0
        %1674 = vmatpush.msra.mxu0 0.0
        %1675 = vmatpush.msra.mxu0 0.0
        %1676 = vmatpush.msra.mxu0 0.0
        %1677 = vmatpush.msra.mxu0 0.0
        %1678 = vmatpush.msra.mxu0 0.0
        %1679 = vmatpush.msra.mxu0 %v1150
        %1680 = vmatmul.f32.gmra.mxu0 %v1662
        %v1681 = vpop.f32.mrf.mxu0
        %v1682 = vadd.f32 0.0, %v1681
        %1683 = vdwg.mxu0
        %v1685 = vsel %vm1161, %v1538, 0
        %1687 = vmatpush.msra.mxu0 0.0
        %1688 = vmatpush.msra.mxu0 0.0
        %1689 = vmatpush.msra.mxu0 0.0
        %1690 = vmatpush.msra.mxu0 0.0
        %1691 = vmatpush.msra.mxu0 0.0
        %1692 = vmatpush.msra.mxu0 0.0
        %1693 = vmatpush.msra.mxu0 0.0
        %1694 = vmatpush.msra.mxu0 0.0
        %1695 = vmatpush.msra.mxu0 0.0
        %1696 = vmatpush.msra.mxu0 0.0
        %1697 = vmatpush.msra.mxu0 0.0
        %1698 = vmatpush.msra.mxu0 0.0
        %1699 = vmatpush.msra.mxu0 0.0
        %1700 = vmatpush.msra.mxu0 0.0
        %1701 = vmatpush.msra.mxu0 0.0
        %1702 = vmatpush.msra.mxu0 %v1152
        %1703 = vmatmul.f32.gmra.mxu0 %v1685
        %v1704 = vpop.f32.mrf.mxu0
        %v1705 = vadd.f32 0.0, %v1704
        %1706 = vdwg.mxu0
        %v1708 = vsel %vm1161, %v1553, 0
        %1710 = vmatpush.msra.mxu0 0.0
        %1711 = vmatpush.msra.mxu0 0.0
        %1712 = vmatpush.msra.mxu0 0.0
        %1713 = vmatpush.msra.mxu0 0.0
        %1714 = vmatpush.msra.mxu0 0.0
        %1715 = vmatpush.msra.mxu0 0.0
        %1716 = vmatpush.msra.mxu0 0.0
        %1717 = vmatpush.msra.mxu0 0.0
        %1718 = vmatpush.msra.mxu0 0.0
        %1719 = vmatpush.msra.mxu0 0.0
        %1720 = vmatpush.msra.mxu0 0.0
        %1721 = vmatpush.msra.mxu0 0.0
        %1722 = vmatpush.msra.mxu0 0.0
        %1723 = vmatpush.msra.mxu0 0.0
        %1724 = vmatpush.msra.mxu0 0.0
        %1725 = vmatpush.msra.mxu0 %v1156
        %1726 = vmatmul.f32.gmra.mxu0 %v1708
        %v1727 = vpop.f32.mrf.mxu0
        %v1728 = vadd.f32 0.0, %v1727
        %1729 = vdwg.mxu0
        %v1731 = vsel %vm1161, %v1568, 0
        %1733 = vmatpush.msra.mxu0 0.0
        %1734 = vmatpush.msra.mxu0 0.0
        %1735 = vmatpush.msra.mxu0 0.0
        %1736 = vmatpush.msra.mxu0 0.0
        %1737 = vmatpush.msra.mxu0 0.0
        %1738 = vmatpush.msra.mxu0 0.0
        %1739 = vmatpush.msra.mxu0 0.0
        %1740 = vmatpush.msra.mxu0 0.0
        %1741 = vmatpush.msra.mxu0 0.0
        %1742 = vmatpush.msra.mxu0 0.0
        %1743 = vmatpush.msra.mxu0 0.0
        %1744 = vmatpush.msra.mxu0 0.0
        %1745 = vmatpush.msra.mxu0 0.0
        %1746 = vmatpush.msra.mxu0 0.0
        %1747 = vmatpush.msra.mxu0 0.0
        %1748 = vmatpush.msra.mxu0 %v1158
        %1749 = vmatmul.f32.gmra.mxu0 %v1731
        %v1750 = vpop.f32.mrf.mxu0
        %v1751 = vadd.f32 0.0, %v1750
        %1752 = vdwg.mxu0
        %1754 = vrot.lane.b32.xlu0 %v1636, 8
        %v1755 = vpop.permute.xlu0 %1754
        %1758 = vrot.lane.b32.xlu0 %v1682, 16
        %v1759 = vpop.permute.xlu0 %1758
        %1762 = vrot.lane.b32.xlu0 %v1728, 24
        %v1763 = vpop.permute.xlu0 %1762
        %v1765 = vsel %vm1161, %v1590, %v1755
        %vm1766 = vcmask 130048
        %v1767 = vsel %vm1766, %v1765, %v1759
        %vm1768 = vcmask 195584
        %v1769 = vsel %vm1768, %v1767, %v1763
        %1771 = vrot.lane.b32.xlu0 %v1659, 8
        %v1772 = vpop.permute.xlu0 %1771
        %1775 = vrot.lane.b32.xlu0 %v1705, 16
        %v1776 = vpop.permute.xlu0 %1775
        %1779 = vrot.lane.b32.xlu0 %v1751, 24
        %v1780 = vpop.permute.xlu0 %1779
        %v1782 = vsel %vm1161, %v1613, %v1772
        %v1783 = vsel %vm1766, %v1782, %v1776
        %v1784 = vsel %vm1768, %v1783, %v1780
        %v1785 = vld [vmem:[%s899] sm:$0xff]
        %v1786 = vld [vmem:[%s899 + $0x8] sm:$0xff]
        %v1787 = vld [vmem:[%s899 + $0x10] sm:$0xff]
        %v1788 = vld [vmem:[%s899 + $0x18] sm:$0xff]
        %v1790 = vsel %vm948, %v1769, 0
        %v1793 = vsel %vm948, %v1784, 0
        %1795 = vmatpush.msra.mxu0 0.0
        %1796 = vmatpush.msra.mxu0 0.0
        %1797 = vmatpush.msra.mxu0 0.0
        %1798 = vmatpush.msra.mxu0 0.0
        %1799 = vmatpush.msra.mxu0 0.0
        %1800 = vmatpush.msra.mxu0 0.0
        %1801 = vmatpush.msra.mxu0 0.0
        %1802 = vmatpush.msra.mxu0 0.0
        %1803 = vmatpush.msra.mxu0 0.0
        %1804 = vmatpush.msra.mxu0 0.0
        %1805 = vmatpush.msra.mxu0 0.0
        %1806 = vmatpush.msra.mxu0 0.0
        %1807 = vmatpush.msra.mxu0 %v1788
        %1808 = vmatpush.msra.mxu0 %v1787
        %1809 = vmatpush.msra.mxu0 %v1786
        %1810 = vmatpush.msra.mxu0 %v1785
        %1811 = vmatmul.f32.gmra.mxu0 %v1790
        %v1812 = vpop.f32.mrf.mxu0
        %v1813 = vadd.f32 0.0, %v1812
        %1814 = vmatmul.f32.gmra.mxu0 %v1793
        %v1815 = vpop.f32.mrf.mxu0
        %v1816 = vadd.f32 0.0, %v1815
        %1817 = vdwg.mxu0
        %v1818 = vadd.f32 %v944, %v1813
        %v1819 = vadd.f32 %v945, %v1816
        %v1820 = vld [vmem:[%s902] sm:$0x1]
        %v1822 = vperm.slane %v1820, 0
        %v1824 = vadd.f32 %v1818, %v1822
        %v1825 = vadd.f32 %v1819, %v1822
        %v1826 = vld [vmem:[%s905] sm:$0x1]
        %v1827 = vld [vmem:[%s908] sm:$0x1]
        %v1828 = vsel %vm948, %v1824, 0.0
        %1829 = vadd.xlane.f32.xlu0 %v1828
        %v1830 = vpop.xlane.xlu0 %1829
        %v1831 = vsel %vm948, %v1825, 0.0
        %1832 = vadd.xlane.f32.xlu0 %v1831
        %v1833 = vpop.xlane.xlu0 %1832
        %v1834 = vmul.f32 %v1830, %v961
        %v1835 = vmul.f32 %v1833, %v961
        %v1836 = vsub.f32 %v1824, %v1834
        %v1837 = vsub.f32 %v1825, %v1835
        %v1838 = vmul.f32 %v1836, %v1836
        %v1839 = vmul.f32 %v1837, %v1837
        %v1840 = vsel %vm948, %v1838, 0.0
        %1841 = vadd.xlane.f32.xlu0 %v1840
        %v1842 = vpop.xlane.xlu0 %1841
        %v1843 = vsel %vm948, %v1839, 0.0
        %1844 = vadd.xlane.f32.xlu0 %v1843
        %v1845 = vpop.xlane.xlu0 %1844
        %v1846 = vmul.f32 %v1842, %v961
        %v1847 = vmul.f32 %v1845, %v961
        %v1848 = vadd.f32 %v1846, 1e-05
        %v1849 = vadd.f32 %v1847, 1e-05
        %v1850 = vrsqrt.pop %v1848
        %v1851 = vmul.f32 %v1850, %v1848
        %v1852 = vmul.f32 %v1851, %v1850
        %v1853 = vmul.f32 0.5, %v1852
        %v1854 = vsub.f32 1.5, %v1853
        %v1855 = vmul.f32 %v1850, %v1854
        %vm1856 = vweird.f32 %v1848
        %vm1857 = vweird.f32 %v1850
        %vm1858 = vmor %vm1856, %vm1857
        %v1859 = vsel %vm1858, %v1850, %v1855
        %v1860 = vrsqrt.pop %v1849
        %v1861 = vmul.f32 %v1860, %v1849
        %v1862 = vmul.f32 %v1861, %v1860
        %v1863 = vmul.f32 0.5, %v1862
        %v1864 = vsub.f32 1.5, %v1863
        %v1865 = vmul.f32 %v1860, %v1864
        %vm1866 = vweird.f32 %v1849
        %vm1867 = vweird.f32 %v1860
        %vm1868 = vmor %vm1866, %vm1867
        %v1869 = vsel %vm1868, %v1860, %v1865
        %v1870 = vmul.f32 %v1836, %v1859
        %v1871 = vmul.f32 %v1837, %v1869
        %v1873 = vperm.slane %v1826, 0
        %v1875 = vmul.f32 %v1870, %v1873
        %v1876 = vmul.f32 %v1871, %v1873
        %v1878 = vperm.slane %v1827, 0
        %v1880 = vadd.f32 %v1875, %v1878
        %v1881 = vadd.f32 %v1876, %v1878
        %v1882 = vld [vmem:[%s913] sm:$0xff]
        %v1883 = vld [vmem:[%s913 + $0x8] sm:$0xff]
        %v1884 = vld [vmem:[%s913 + $0x10] sm:$0xff]
        %v1885 = vld [vmem:[%s913 + $0x18] sm:$0xff]
        %v1886 = vld [vmem:[%s916] sm:$0x1]
        %v1888 = vperm.slane %v1886, 0
        %v1891 = vsel %vm948, %v1880, 0
        %v1894 = vsel %vm948, %v1881, 0
        %1896 = vmatpush.msra.mxu0 0.0
        %1897 = vmatpush.msra.mxu0 0.0
        %1898 = vmatpush.msra.mxu0 0.0
        %1899 = vmatpush.msra.mxu0 0.0
        %1900 = vmatpush.msra.mxu0 0.0
        %1901 = vmatpush.msra.mxu0 0.0
        %1902 = vmatpush.msra.mxu0 0.0
        %1903 = vmatpush.msra.mxu0 0.0
        %1904 = vmatpush.msra.mxu0 0.0
        %1905 = vmatpush.msra.mxu0 0.0
        %1906 = vmatpush.msra.mxu0 0.0
        %1907 = vmatpush.msra.mxu0 0.0
        %1908 = vmatpush.msra.mxu0 %v1885
        %1909 = vmatpush.msra.mxu0 %v1884
        %1910 = vmatpush.msra.mxu0 %v1883
        %1911 = vmatpush.msra.mxu0 %v1882
        %1912 = vmatmul.f32.gmra.mxu0 %v1891
        %v1913 = vpop.f32.mrf.mxu0
        %v1914 = vadd.f32 %v1888, %v1913
        %1915 = vmatmul.f32.gmra.mxu0 %v1894
        %v1916 = vpop.f32.mrf.mxu0
        %v1917 = vadd.f32 %v1888, %v1916
        %1918 = vdwg.mxu0
        %v1919 = vmul.f32 %v1914, 0.5
        %v1920 = vmul.f32 %v1917, 0.5
        %v1921 = vmul.f32 %v1914, 0.044715
        %v1922 = vmul.f32 %v1917, 0.044715
        %v1923 = vmul.f32 %v1921, %v1914
        %v1924 = vmul.f32 %v1922, %v1917
        %v1925 = vmul.f32 %v1923, %v1914
        %v1926 = vmul.f32 %v1924, %v1917
        %v1927 = vadd.f32 %v1914, %v1925
        %v1928 = vadd.f32 %v1917, %v1926
        %v1929 = vmul.f32 %v1927, 0.7978846
        %v1930 = vmul.f32 %v1928, 0.7978846
        %v1931 = vtanh.pop %v1929
        %v1932 = vtanh.pop %v1930
        %v1933 = vadd.f32 %v1931, 1.0
        %v1934 = vadd.f32 %v1932, 1.0
        %v1935 = vmul.f32 %v1919, %v1933
        %v1936 = vmul.f32 %v1920, %v1934
        %v1937 = vld [vmem:[%s921] sm:$0xff]
        %v1938 = vld [vmem:[%s921 + $0x8] sm:$0xff]
        %v1939 = vld [vmem:[%s921 + $0x10] sm:$0xff]
        %v1940 = vld [vmem:[%s921 + $0x18] sm:$0xff]
        %v1941 = vld [vmem:[%s921 + $0x20] sm:$0xff]
        %v1942 = vld [vmem:[%s921 + $0x28] sm:$0xff]
        %v1943 = vld [vmem:[%s921 + $0x30] sm:$0xff]
        %v1944 = vld [vmem:[%s921 + $0x38] sm:$0xff]
        %v1945 = vld [vmem:[%s921 + $0x40] sm:$0xff]
        %v1946 = vld [vmem:[%s921 + $0x48] sm:$0xff]
        %v1947 = vld [vmem:[%s921 + $0x50] sm:$0xff]
        %v1948 = vld [vmem:[%s921 + $0x58] sm:$0xff]
        %v1949 = vld [vmem:[%s921 + $0x60] sm:$0xff]
        %v1950 = vld [vmem:[%s921 + $0x68] sm:$0xff]
        %v1951 = vld [vmem:[%s921 + $0x70] sm:$0xff]
        %v1952 = vld [vmem:[%s921 + $0x78] sm:$0xff]
        %v1953 = vld [vmem:[%s924] sm:$0x1]
        %v1955 = vperm.slane %v1953, 0
        %1957 = vmatpush.msra.mxu0 %v1952
        %1958 = vmatpush.msra.mxu0 %v1951
        %1959 = vmatpush.msra.mxu0 %v1950
        %1960 = vmatpush.msra.mxu0 %v1949
        %1961 = vmatpush.msra.mxu0 %v1948
        %1962 = vmatpush.msra.mxu0 %v1947
        %1963 = vmatpush.msra.mxu0 %v1946
        %1964 = vmatpush.msra.mxu0 %v1945
        %1965 = vmatpush.msra.mxu0 %v1944
        %1966 = vmatpush.msra.mxu0 %v1943
        %1967 = vmatpush.msra.mxu0 %v1942
        %1968 = vmatpush.msra.mxu0 %v1941
        %1969 = vmatpush.msra.mxu0 %v1940
        %1970 = vmatpush.msra.mxu0 %v1939
        %1971 = vmatpush.msra.mxu0 %v1938
        %1972 = vmatpush.msra.mxu0 %v1937
        %1973 = vmatmul.f32.gmra.mxu0 %v1935
        %v1974 = vpop.f32.mrf.mxu0
        %v1975 = vadd.f32 %v1955, %v1974
        %1976 = vmatmul.f32.gmra.mxu0 %v1936
        %v1977 = vpop.f32.mrf.mxu0
        %v1978 = vadd.f32 %v1955, %v1977
        %1979 = vdwg.mxu0
        %v1980 = vadd.f32 %v1824, %v1975
        %v1981 = vadd.f32 %v1825, %v1978
        %1982 = vst.msk [vmem:[#allocation2] sm:$0xff] %vm948, %v1980
        %1983 = vst.msk [vmem:[#allocation2 + $0x8] sm:$0xff] %vm948, %v1981
        %p1984 = scmp.eq.s32.totalorder %s35, 1
        // Predicated region
        $region105: #{gpt2_forward.1} parent=99 // pred_check
          %p1985 = pneg %p1984
        $region106: #{gpt2_forward.1} parent=99 // pred_check_branch
          %1987 = sbr.rel (%p1985) target = $region108
        $region107: #{gpt2_forward.1} parent=99 // pred_region
          %v1988 = vld [vmem:[#allocation2] sm:$0xff]
          %v1989 = vld [vmem:[#allocation2 + $0x8] sm:$0xff]
          %v1990 = vld [vmem:[%s17] sm:$0x1]
          %v1991 = vld [vmem:[%s18] sm:$0x1]
          %v1992 = vsel %vm948, %v1988, 0.0
          %1993 = vadd.xlane.f32.xlu0 %v1992
          %v1994 = vpop.xlane.xlu0 %1993
          %v1995 = vsel %vm948, %v1989, 0.0
          %1996 = vadd.xlane.f32.xlu0 %v1995
          %v1997 = vpop.xlane.xlu0 %1996
          %v1998 = vmul.f32 %v1994, %v961
          %v1999 = vmul.f32 %v1997, %v961
          %v2000 = vsub.f32 %v1988, %v1998
          %v2001 = vsub.f32 %v1989, %v1999
          %v2002 = vmul.f32 %v2000, %v2000
          %v2003 = vmul.f32 %v2001, %v2001
          %v2004 = vsel %vm948, %v2002, 0.0
          %2005 = vadd.xlane.f32.xlu0 %v2004
          %v2006 = vpop.xlane.xlu0 %2005
          %v2007 = vsel %vm948, %v2003, 0.0
          %2008 = vadd.xlane.f32.xlu0 %v2007
          %v2009 = vpop.xlane.xlu0 %2008
          %v2010 = vmul.f32 %v2006, %v961
          %v2011 = vmul.f32 %v2009, %v961
          %v2012 = vadd.f32 %v2010, 1e-05
          %v2013 = vadd.f32 %v2011, 1e-05
          %v2014 = vrsqrt.pop %v2012
          %v2015 = vmul.f32 %v2014, %v2012
          %v2016 = vmul.f32 %v2015, %v2014
          %v2017 = vmul.f32 0.5, %v2016
          %v2018 = vsub.f32 1.5, %v2017
          %v2019 = vmul.f32 %v2014, %v2018
          %vm2020 = vweird.f32 %v2012
          %vm2021 = vweird.f32 %v2014
          %vm2022 = vmor %vm2020, %vm2021
          %v2023 = vsel %vm2022, %v2014, %v2019
          %v2024 = vrsqrt.pop %v2013
          %v2025 = vmul.f32 %v2024, %v2013
          %v2026 = vmul.f32 %v2025, %v2024
          %v2027 = vmul.f32 0.5, %v2026
          %v2028 = vsub.f32 1.5, %v2027
          %v2029 = vmul.f32 %v2024, %v2028
          %vm2030 = vweird.f32 %v2013
          %vm2031 = vweird.f32 %v2024
          %vm2032 = vmor %vm2030, %vm2031
          %v2033 = vsel %vm2032, %v2024, %v2029
          %v2034 = vmul.f32 %v2000, %v2023
          %v2035 = vmul.f32 %v2001, %v2033
          %v2037 = vperm.slane %v1990, 0
          %v2039 = vmul.f32 %v2034, %v2037
          %v2040 = vmul.f32 %v2035, %v2037
          %v2042 = vperm.slane %v1991, 0
          %v2044 = vadd.f32 %v2039, %v2042
          %v2045 = vadd.f32 %v2040, %v2042
          %v2046 = vld [vmem:[%s19] sm:$0xff]
          %v2047 = vld [vmem:[%s19 + $0x8] sm:$0xff]
          %v2048 = vld [vmem:[%s19 + $0x10] sm:$0xff]
          %v2049 = vld [vmem:[%s19 + $0x18] sm:$0xff]
          %v2050 = vld [vmem:[%s19 + $0x20] sm:$0xff]
          %v2051 = vld [vmem:[%s19 + $0x28] sm:$0xff]
          %v2052 = vld [vmem:[%s19 + $0x30] sm:$0xff]
          %v2053 = vld [vmem:[%s19 + $0x38] sm:$0xff]
          %v2054 = vld [vmem:[%s19 + $0x40] sm:$0xff]
          %v2055 = vld [vmem:[%s19 + $0x48] sm:$0xff]
          %v2056 = vld [vmem:[%s19 + $0x50] sm:$0xff]
          %v2057 = vld [vmem:[%s19 + $0x58] sm:$0xff]
          %v2058 = vld [vmem:[%s19 + $0x60] sm:$0xff]
          %v2059 = vld [vmem:[%s19 + $0x68] sm:$0xff]
          %v2060 = vld [vmem:[%s19 + $0x70] sm:$0xff]
          %v2061 = vld [vmem:[%s19 + $0x78] sm:$0xff]
          %v2063 = vsel %vm948, %v2044, 0
          %v2066 = vsel %vm948, %v2045, 0
          %v2069 = vsel %vm948, %v2046, 0
          %v2072 = vsel %vm948, %v2047, 0
          %v2075 = vsel %vm948, %v2048, 0
          %v2078 = vsel %vm948, %v2049, 0
          %v2081 = vsel %vm948, %v2050, 0
          %v2084 = vsel %vm948, %v2051, 0
          %v2087 = vsel %vm948, %v2052, 0
          %v2090 = vsel %vm948, %v2053, 0
          %v2093 = vsel %vm948, %v2054, 0
          %v2096 = vsel %vm948, %v2055, 0
          %v2099 = vsel %vm948, %v2056, 0
          %v2102 = vsel %vm948, %v2057, 0
          %v2105 = vsel %vm948, %v2058, 0
          %v2108 = vsel %vm948, %v2059, 0
          %v2111 = vsel %vm948, %v2060, 0
          %v2114 = vsel %vm948, %v2061, 0
          %2116 = vmatpush.xpose.msra.mxu0 %v2114
          %2117 = vmatpush.xpose.msra.mxu0 %v2111
          %2118 = vmatpush.xpose.msra.mxu0 %v2108
          %2119 = vmatpush.xpose.msra.mxu0 %v2105
          %2120 = vmatpush.xpose.msra.mxu0 %v2102
          %2121 = vmatpush.xpose.msra.mxu0 %v2099
          %2122 = vmatpush.xpose.msra.mxu0 %v2096
          %2123 = vmatpush.xpose.msra.mxu0 %v2093
          %2124 = vmatpush.xpose.msra.mxu0 %v2090
          %2125 = vmatpush.xpose.msra.mxu0 %v2087
          %2126 = vmatpush.xpose.msra.mxu0 %v2084
          %2127 = vmatpush.xpose.msra.mxu0 %v2081
          %2128 = vmatpush.xpose.msra.mxu0 %v2078
          %2129 = vmatpush.xpose.msra.mxu0 %v2075
          %2130 = vmatpush.xpose.msra.mxu0 %v2072
          %2131 = vmatpush.xpose.msra.mxu0 %v2069
          %2132 = vmatmul.f32.gmra.mxu0 %v2063
          %v2133 = vpop.f32.mrf.mxu0
          %v2134 = vadd.f32 0.0, %v2133
          %2135 = vmatmul.f32.gmra.mxu0 %v2066
          %v2136 = vpop.f32.mrf.mxu0
          %v2137 = vadd.f32 0.0, %v2136
          %2138 = vdwg.mxu0
          %2139 = vst [vmem:[#allocation3] sm:$0xff] %v2134
          %2140 = vst [vmem:[#allocation3 + $0x8] sm:$0xff] %v2137
        $region108: #{gpt2_forward.1} parent=99 // pred_fallthru
          _
        %p2141 = scmp.lt.s32.totalorder %s35, 1
        %s2142 = scalar_select %p2141, %s35, 1
        %s2143 = smul.addr %s2142, 2
        %s2144 = smul.addr %s2143, 8
        %s2145 = scalar_lea.vmem %s21, %s2144
        %p2146 = scmp.lt.s32.totalorder %s35, 1
        %s2147 = scalar_select %p2146, %s35, 1
        %s2148 = smul.addr %s2147, 2
        %s2149 = smul.addr %s2148, 8
        %s2150 = scalar_lea.vmem %s22, %s2149
        // Predicated region
        $region109: #{gpt2_forward.1} parent=99 // pred_check
          %p2151 = pneg %p548
        $region110: #{gpt2_forward.1} parent=99 // pred_check_branch
          %2153 = sbr.rel (%p2151) target = $region112
        $region111: #{gpt2_forward.1} parent=99 // pred_region
          %2155 = vsyncadd [#allocation4], 0
          %s2156 = sshll.u32 [#allocation3], 4
          %s2157 = int_to_ptr.vmem [resolvable:$true] %s2156
          %s2158 = sshll.u32 %s20, 4
          %s2159 = int_to_ptr.hbm [resolvable:$true] %s2158
          %2164 = dma.vmem_to_hbm [thread:$0]  %s2157, 256, %s2159, [#allocation4], 128, 128, 8
        $region112: #{gpt2_forward.1} parent=99 // pred_fallthru
          _
        // Predicated region
        $region113: #{gpt2_forward.1} parent=99 // pred_check
          %p2165 = pneg %p574
        $region114: #{gpt2_forward.1} parent=99 // pred_check_branch
          %2167 = sbr.rel (%p2165) target = $region116
        $region115: #{gpt2_forward.1} parent=99 // pred_region
          _
        $region116: #{gpt2_forward.1} parent=99 // pred_fallthru
          _
        // Predicated region
        $region117: #{gpt2_forward.1} parent=99 // pred_check
          %p2168 = pneg %p600
        $region118: #{gpt2_forward.1} parent=99 // pred_check_branch
          %2170 = sbr.rel (%p2168) target = $region120
        $region119: #{gpt2_forward.1} parent=99 // pred_region
          _
        $region120: #{gpt2_forward.1} parent=99 // pred_fallthru
          _
        // Predicated region
        $region121: #{gpt2_forward.1} parent=99 // pred_check
          %p2171 = pneg %p548
        $region122: #{gpt2_forward.1} parent=99 // pred_check_branch
          %2173 = sbr.rel (%p2171) target = $region124
        $region123: #{gpt2_forward.1} parent=99 // pred_region
          %2175 = dma.done [#allocation4], 256
        $region124: #{gpt2_forward.1} parent=99 // pred_fallthru
          _
      $region100: #{gpt2_forward.1} parent=5 // pred_fallthru
        _
      %p2176 = scmp.le.s32.totalorder 2, %s30
      // Predicated region
      $region125: #{gpt2_forward.1} parent=5 // pred_check
        %p2177 = pneg %p2176
      $region126: #{gpt2_forward.1} parent=5 // pred_check_branch
        %2179 = sbr.rel (%p2177) target = $region128
      $region127: #{gpt2_forward.1} parent=5 // pred_region
        %s2180 = ssub.s32 %s30, 2
        // Predicated region
        $region129: #{gpt2_forward.1} parent=127 // pred_check
          %p2181 = pneg %p580
        $region130: #{gpt2_forward.1} parent=127 // pred_check_branch
          %2183 = sbr.rel (%p2181) target = $region132
        $region131: #{gpt2_forward.1} parent=127 // pred_region
          %p2184 = scmp.lt.s32.totalorder %s36, 1
          %s2185 = scalar_select %p2184, %s36, 1
          %s2186 = smul.addr %s2185, 2
          %s2187 = smul.addr %s2186, 8
          %s2188 = scalar_lea.vmem %s21, %s2187
        $region132: #{gpt2_forward.1} parent=127 // pred_fallthru
          _
        // Predicated region
        $region133: #{gpt2_forward.1} parent=127 // pred_check
          %p2189 = pneg %p606
        $region134: #{gpt2_forward.1} parent=127 // pred_check_branch
          %2191 = sbr.rel (%p2189) target = $region136
        $region135: #{gpt2_forward.1} parent=127 // pred_region
          %p2192 = scmp.lt.s32.totalorder %s36, 1
          %s2193 = scalar_select %p2192, %s36, 1
          %s2194 = smul.addr %s2193, 2
          %s2195 = smul.addr %s2194, 8
          %s2196 = scalar_lea.vmem %s22, %s2195
        $region136: #{gpt2_forward.1} parent=127 // pred_fallthru
          _
      $region128: #{gpt2_forward.1} parent=5 // pred_fallthru
        _
    $region6: #{gpt2_forward.1} parent=1 // loop_footer
      %s34 = sadd.s32 1, %s30
    $region7: #{gpt2_forward.1} parent=1 // loop_footer_branch
      %29 = sbr.rel target = $region3
    $region8: #{gpt2_forward.1} parent=1 // loop_exit
      _
    %2197 = vsyncpa [#allocation4], 1
    %s2198 = scalar_lea.sflag [#allocation4], 1
    %2199 = vsyncpa %s2198, 1

</llo_original>
